<compile_context>
chip_gen: v6e
topology: v6e:2x2x1
jax: 0.10.0
libtpu: 0.0.40
codegen_flags: <defaults>
</compile_context>

<pallas_src>
import jax
import jax.numpy as jnp
from jax.experimental import pallas as pl
from jax.experimental.pallas import tpu as pltpu

# ---- model config (small shapes consistent with the module) ----
ENTITY_SIZE = 32          # entity_size
WORD_SIZE = 32            # word_size
OUT_CHANNELS = WORD_SIZE  # word_out_channels defaults to word_size
VE_SIZE = 32              # enriched_vector_size (must equal WORD_SIZE for cos_w)
WORD_NUM = 8              # word_num
KSIZE = 3                 # conv_kernel_size
K_KERNELS = 11            # K
EPS = 1e-6                # cosine-similarity eps
BN_EPS = 1e-6

# RBF kernel constants — fixed by the module definition, baked into the kernel.
MUS = (1.0,) + tuple(i / 10.0 for i in range(-9, 10, 2))
SIGMA_SQR = (0.001 ** 2,) + (0.1 ** 2,) * (K_KERNELS - 1)
INV2S = tuple(1.0 / (2.0 * s) for s in SIGMA_SQR)

# Static row offsets inside the coalesced weight slab (all 8-aligned).
CONVW_ROWS = KSIZE * WORD_SIZE                 # 96
CONVB_OFF = CONVW_ROWS                         # 96  (conv bias, padded to 8 rows)
FC1_OFF = CONVB_OFF + 8                        # 104 (merged fc1 weight, 64 rows)
W_OFF = FC1_OFF + ENTITY_SIZE + OUT_CHANNELS   # 168 (pre-normalised doc_W rows)


# ============================ Pallas kernel ============================

def _make_kesm_kernel(n_rows, n_w_pad):
    """Fused KEE + KIM + Linear(2K,1) + tanh for all stacked rows.

    Rows 0..nd-1 of the stacked input are the document entities; scores are
    produced for every row and the wrapper slices out the pos/neg query rows."""
    n_cols = n_rows + n_w_pad

    def kernel(fc2b_ref, slab_ref, wk_ref, win_ref, ent_ref, out_ref):
        # ---- carve the coalesced weight slab (static, 8-aligned slices) ----
        convw = slab_ref[0:CONVW_ROWS, :]               # (96, C)  BN folded
        convb = slab_ref[CONVB_OFF:CONVB_OFF + 1, :]    # (1, C)   bias + BN shift
        fc1w = slab_ref[FC1_OFF:W_OFF, :]               # (E+C, VE) merged fc1
        w_n = slab_ref[W_OFF:W_OFF + n_w_pad, :]        # (Nw_pad, W) unit rows

        # ---- KnowledgeEnrichedEmbedding: conv(as matmul) -> ReLU -> maxpool ----
        conv = jax.lax.dot_general(
            win_ref[...], convw,
            dimension_numbers=(((2,), (0,)), ((), ())),
            preferred_element_type=jnp.float32)         # (N, P, C)
        conv = conv + convb[None]                       # folded bias + BN
        pooled = jnp.max(jnp.maximum(conv, 0.0), axis=1)  # (N, C)

        # single 64-deep fc1 matmul on lane-concatenated [entities | pooled]
        feat = jnp.concatenate([ent_ref[...], pooled], axis=1)          # (N, E+C)
        ve = jnp.dot(feat, fc1w, preferred_element_type=jnp.float32)    # (N, VE)

        # ---- cosine similarities via pre-normalised rows (rsqrt on EUP) ----
        # NOTE: clamps |a| to EPS (vs reference's max(|a||b|, EPS)); identical for
        # all non-degenerate rows, and padded rows are exactly zero.
        ss = jnp.sum(ve * ve, axis=1, keepdims=True)
        ve_n = ve * jax.lax.rsqrt(jnp.maximum(ss, EPS * EPS))           # (N, VE)

        # one MXU matmul gives both cos_e (doc columns) and cos_w (word columns)
        rhs = jnp.concatenate([ve_n, w_n], axis=0)                      # (n_cols, VE)
        cos_all = jax.lax.dot_general(
            ve_n, rhs, dimension_numbers=(((1,), (1,)), ((), ())),
            preferred_element_type=jnp.float32)                         # (N, n_cols)

        # ---- K RBF kernels fused with Linear(2K,1) + tanh.
        #      exp on the concatenated 2-D cosine tile (EUP), per-lane fc2 weights
        #      precomputed in the wrapper (doc-mask & pad-mask baked in), and a
        #      single cross-lane reduce at the end. ----
        wk = wk_ref[...]                                                # (K, n_cols)
        acc2d = jnp.zeros((n_rows, n_cols), jnp.float32)
        for k in range(K_KERNELS):
            d = cos_all - MUS[k]
            acc2d = acc2d + jnp.exp(d * d * (-INV2S[k])) * wk[k:k + 1, :]
        score = jnp.sum(acc2d, axis=1, keepdims=True) + fc2b_ref[0]     # (N, 1)
        out_ref[...] = jnp.tanh(score)

    return kernel


def kesm_pallas(fc2_b, slab, wk, windows, entities, n_rows, n_w_pad):
    vmem = pl.BlockSpec(memory_space=pltpu.MemorySpace.VMEM)
    smem = pl.BlockSpec(memory_space=pltpu.MemorySpace.SMEM)
    return pl.pallas_call(
        _make_kesm_kernel(n_rows, n_w_pad),
        out_shape=jax.ShapeDtypeStruct((n_rows, 1), jnp.float32),
        in_specs=[smem, vmem, vmem, vmem, vmem],
        out_specs=vmem,
    )(fc2_b, slab, wk, windows, entities)


# ============================ glue (plain JAX) ============================

def im2col(words, k):
    """words: (N, T, Wd) -> (N, T-k+1, k*Wd); matches Conv2d(kernel=(k, Wd))."""
    n, t, wd = words.shape
    p = t - k + 1
    return jnp.concatenate([words[:, i:i + p, :] for i in range(k)], axis=-1)


def make_params(key):
    ks = jax.random.split(key, 6)
    conv_w = 0.1 * jax.random.normal(ks[0], (OUT_CHANNELS, 1, KSIZE, WORD_SIZE), jnp.float32)
    conv_b = 0.1 * jax.random.normal(ks[1], (OUT_CHANNELS,), jnp.float32)
    bn_gamma = 1.0 + 0.1 * jax.random.normal(ks[2], (OUT_CHANNELS,), jnp.float32)
    bn_beta = 0.1 * jax.random.normal(ks[3], (OUT_CHANNELS,), jnp.float32)
    bn_mean = jnp.zeros((OUT_CHANNELS,), jnp.float32)     # BN running stats (eval)
    bn_var = jnp.ones((OUT_CHANNELS,), jnp.float32)
    fc1_w = 0.1 * jax.random.normal(ks[4], (VE_SIZE, ENTITY_SIZE + OUT_CHANNELS), jnp.float32)
    fc2_w = 0.1 * jax.random.normal(ks[5], (1, 2 * K_KERNELS), jnp.float32)
    fc2_b = jnp.array([0.05], jnp.float32)

    bn_scale = bn_gamma / jnp.sqrt(bn_var + BN_EPS)
    bn_shift = bn_beta - bn_mean * bn_scale
    convw_mat = conv_w.reshape(OUT_CHANNELS, KSIZE * WORD_SIZE).T     # (k*W, C)

    # Coalesced, kernel-friendly weight slab: rows [convw | convb(pad 8) | fc1_w.T].
    convw_folded = convw_mat * bn_scale[None, :]                      # (96, C)
    convb_folded = (conv_b * bn_scale + bn_shift)[None, :]            # (1, C)
    convb_block = jnp.pad(convb_folded, ((0, 7), (0, 0)))             # (8, C)
    weight_slab = jnp.concatenate([convw_folded, convb_block, fc1_w.T], axis=0)  # (168, 32)

    return dict(
        # raw (used by the pure-JAX reference)
        conv_w=conv_w, conv_b=conv_b, bn_gamma=bn_gamma, bn_beta=bn_beta,
        bn_mean=bn_mean, bn_var=bn_var, fc1_w=fc1_w, fc2_w=fc2_w, fc2_b=fc2_b,
        mus=jnp.array(MUS, jnp.float32), sigma_sqr=jnp.array(SIGMA_SQR, jnp.float32),
        convw_mat=convw_mat,
        # folded / coalesced kernel layout
        weight_slab=weight_slab,
    )


def kesm_forward(prm, pos_E, pos_desc, neg_E, neg_desc, doc_E, doc_desc, doc_W):
    """Pallas implementation of KESMSalienceEstimation.forward (eval mode).

    Stacking contract (baked into the kernel / wk mask): document rows FIRST,
    then pos queries, then neg queries, zero padding LAST."""
    nd, qp, qn = doc_E.shape[0], pos_E.shape[0], neg_E.shape[0]
    nw = doc_W.shape[0]

    # Row-stack doc / pos / neg so the whole forward is a single kernel launch.
    words_all = jnp.concatenate(
        [doc_desc.reshape(-1, WORD_NUM, WORD_SIZE),
         pos_desc.reshape(-1, WORD_NUM, WORD_SIZE),
         neg_desc.reshape(-1, WORD_NUM, WORD_SIZE)], axis=0)
    ents_all = jnp.concatenate(
        [doc_E.reshape(-1, ENTITY_SIZE),
         pos_E.reshape(-1, ENTITY_SIZE),
         neg_E.reshape(-1, ENTITY_SIZE)], axis=0)

    win_all = im2col(words_all, KSIZE)                     # (N, P, k*W)
    n = win_all.shape[0]
    n_rows = n + ((-n) % 8)                                # sublane-align rows
    if n_rows != n:
        win_all = jnp.pad(win_all, ((0, n_rows - n), (0, 0), (0, 0)))
        ents_all = jnp.pad(ents_all, ((0, n_rows - n), (0, 0)))

    # Pre-normalise doc_W rows (hoists rsqrt / lane-reduce out of the kernel).
    n_w_pad = nw + ((-nw) % 8)
    ssw = jnp.sum(doc_W * doc_W, axis=1, keepdims=True)
    w_n = doc_W * jax.lax.rsqrt(jnp.maximum(ssw, EPS * EPS))
    w_n = jnp.pad(w_n, ((0, n_w_pad - nw), (0, 0)))        # (n_w_pad, W)

    # Per-lane fc2 weights for the fused RBF loop: column c of cos_all gets
    #   fc2_w[k]   if c < nd          (real doc-entity column)
    #   0          if nd <= c < n_rows (query / pad rows excluded from E-sum)
    #   fc2_w[K+k] if c is a real word column, else 0 (padded word rows).
    fc2w = prm['fc2_w'][0]
    col_doc = (jnp.arange(n_rows) < nd).astype(jnp.float32)
    col_w = (jnp.arange(n_w_pad) < nw).astype(jnp.float32)
    wk = jnp.concatenate(
        [fc2w[:K_KERNELS, None] * col_doc[None, :],
         fc2w[K_KERNELS:, None] * col_w[None, :]], axis=1)  # (K, n_rows + n_w_pad)

    # One coalesced VMEM slab: [convw | convb | fc1_w.T | normalised doc_W].
    slab = jnp.concatenate([prm['weight_slab'], w_n], axis=0)   # (168 + n_w_pad, 32)

    scores = kesm_pallas(prm['fc2_b'], slab, wk, win_all, ents_all,
                         n_rows, n_w_pad)                   # (n_rows, 1)

    out_pos = scores[nd:nd + qp]
    out_neg = scores[nd + qp:nd + qp + qn]
    # dropout: identity in eval mode
    return out_pos, out_neg


# ---------------------- pure-JAX reference (for checking) ----------------------

def ref_forward(prm, pos_E, pos_desc, neg_E, neg_desc, doc_E, doc_desc, doc_W):
    def kee(entities, words):
        b, ne, _ = entities.shape
        win = im2col(words, KSIZE)                                      # (N, P, k*W)
        conv = jnp.einsum('npk,kc->npc', win, prm['convw_mat']) + prm['conv_b']
        bn = ((conv - prm['bn_mean']) / jnp.sqrt(prm['bn_var'] + BN_EPS)
              * prm['bn_gamma'] + prm['bn_beta'])
        act = jnp.maximum(bn, 0.0)
        pooled = jnp.max(act, axis=1)                                   # (N, C)
        flattened = pooled.reshape(b, ne, OUT_CHANNELS)
        concat = jnp.concatenate([entities, flattened], axis=2)
        return concat @ prm['fc1_w'].T

    def kim(ve, E, W):  # ve (Q,1,D), E (1,Nd,D), W (1,Nw,D)
        def cos(a, bb):
            dot = jnp.sum(a * bb, axis=2)
            na = jnp.sqrt(jnp.sum(a * a, axis=2))
            nb = jnp.sqrt(jnp.sum(bb * bb, axis=2))
            return dot / jnp.maximum(na * nb, EPS)
        ce, cw = cos(ve, E), cos(ve, W)
        mus, s2 = prm['mus'], prm['sigma_sqr']
        phi_e = jnp.stack([jnp.sum(jnp.exp(-(ce - mus[i]) ** 2 / (2 * s2[i])), axis=1)
                           for i in range(K_KERNELS)], axis=1)
        phi_w = jnp.stack([jnp.sum(jnp.exp(-(cw - mus[i]) ** 2 / (2 * s2[i])), axis=1)
                           for i in range(K_KERNELS)], axis=1)
        return jnp.concatenate([phi_e, phi_w], axis=1)                  # (Q, 2K)

    doc_KEE = kee(doc_E[None], doc_desc)
    pos_KEE = kee(pos_E, pos_desc.reshape(-1, WORD_NUM, WORD_SIZE))
    neg_KEE = kee(neg_E, neg_desc.reshape(-1, WORD_NUM, WORD_SIZE))
    doc_Wb = doc_W[None]
    pos_Phi = kim(pos_KEE, doc_KEE, doc_Wb)
    neg_Phi = kim(neg_KEE, doc_KEE, doc_Wb)
    out_pos = jnp.tanh(pos_Phi @ prm['fc2_w'].T + prm['fc2_b'])
    out_neg = jnp.tanh(neg_Phi @ prm['fc2_w'].T + prm['fc2_b'])
    return out_pos, out_neg


# ============================ main ============================

if __name__ == "__main__":
    key = jax.random.PRNGKey(0)
    kp, kd = jax.random.split(key)
    prm = make_params(kp)

    QP, QN, ND, NW = 4, 5, 6, 10
    ks = jax.random.split(kd, 7)
    pos_E = jax.random.normal(ks[0], (QP, 1, ENTITY_SIZE), jnp.float32)
    pos_desc = jax.random.normal(ks[1], (QP, 1, WORD_NUM, WORD_SIZE), jnp.float32)
    neg_E = jax.random.normal(ks[2], (QN, 1, ENTITY_SIZE), jnp.float32)
    neg_desc = jax.random.normal(ks[3], (QN, 1, WORD_NUM, WORD_SIZE), jnp.float32)
    doc_E = jax.random.normal(ks[4], (ND, ENTITY_SIZE), jnp.float32)
    doc_desc = jax.random.normal(ks[5], (ND, WORD_NUM, WORD_SIZE), jnp.float32)
    doc_W = jax.random.normal(ks[6], (NW, WORD_SIZE), jnp.float32)

    fwd = jax.jit(kesm_forward)
    out_pos, out_neg = fwd(prm, pos_E, pos_desc, neg_E, neg_desc,
                           doc_E, doc_desc, doc_W)
    jax.block_until_ready((out_pos, out_neg))

    ref_pos, ref_neg = ref_forward(prm, pos_E, pos_desc, neg_E, neg_desc,
                                   doc_E, doc_desc, doc_W)
    assert out_pos.shape == (QP, 1) and out_neg.shape == (QN, 1)
    assert jnp.allclose(out_pos, ref_pos, atol=2e-4, rtol=2e-4), (out_pos, ref_pos)
    assert jnp.allclose(out_neg, ref_neg, atol=2e-4, rtol=2e-4), (out_neg, ref_neg)

    print("KERNEL_OK")
</pallas_src>

<mosaic_0001>
module attributes {stable_mosaic.version = 11 : i64} {
  func.func @kernel(%arg0: memref<1xf32, #tpu.memory_space<smem>>, %arg1: memref<184x32xf32, #tpu.memory_space<vmem>>, %arg2: memref<11x32xf32, #tpu.memory_space<vmem>>, %arg3: memref<16x6x96xf32, #tpu.memory_space<vmem>>, %arg4: memref<16x32xf32, #tpu.memory_space<vmem>>, %arg5: memref<16x1xf32, #tpu.memory_space<vmem>>) attributes {dimension_semantics = [], scalar_prefetch = 0 : i64, scratch_operands = 0 : i64, tpu.core_type = #tpu.core_type<tc>} {
    %c0 = arith.constant 0 : index
    %c0_0 = arith.constant 0 : index
    %0 = vector.load %arg1[%c0, %c0_0] : memref<184x32xf32, #tpu.memory_space<vmem>>, vector<96x32xf32>
    %c96 = arith.constant 96 : index
    %c0_1 = arith.constant 0 : index
    %1 = vector.load %arg1[%c96, %c0_1] : memref<184x32xf32, #tpu.memory_space<vmem>>, vector<1x32xf32>
    %c104 = arith.constant 104 : index
    %c0_2 = arith.constant 0 : index
    %2 = vector.load %arg1[%c104, %c0_2] : memref<184x32xf32, #tpu.memory_space<vmem>>, vector<64x32xf32>
    %c168 = arith.constant 168 : index
    %c0_3 = arith.constant 0 : index
    %3 = vector.load %arg1[%c168, %c0_3] : memref<184x32xf32, #tpu.memory_space<vmem>>, vector<16x32xf32>
    %c0_4 = arith.constant 0 : index
    %c0_5 = arith.constant 0 : index
    %c0_6 = arith.constant 0 : index
    %4 = vector.load %arg3[%c0_4, %c0_5, %c0_6] : memref<16x6x96xf32, #tpu.memory_space<vmem>>, vector<16x6x96xf32>
    %cst = arith.constant dense<0.000000e+00> : vector<16x6x32xf32>
    %5 = tpu.matmul %4, %0, %cst {dimension_numbers = #tpu.dot_dimension_numbers<[2], [0], [0, 1], [1], [0, 0, 0, 1, 1, 1], [], []>} : vector<16x6x96xf32>, vector<96x32xf32>, vector<16x6x32xf32> -> vector<16x6x32xf32>
    %6 = vector.shape_cast %1 : vector<1x32xf32> to vector<1x1x32xf32>
    %7 = vector.broadcast %6 : vector<1x1x32xf32> to vector<16x6x32xf32>
    %8 = arith.addf %5, %7 : vector<16x6x32xf32>
    %cst_7 = arith.constant 0.000000e+00 : f32
    %9 = vector.broadcast %cst_7 : f32 to vector<16x6x32xf32>
    %10 = arith.maximumf %8, %9 : vector<16x6x32xf32>
    %cst_8 = arith.constant dense<0xFF800000> : vector<16x32xf32>
    %11 = vector.multi_reduction <maximumf>, %10, %cst_8 [1] : vector<16x6x32xf32> to vector<16x32xf32>
    %c0_9 = arith.constant 0 : index
    %c0_10 = arith.constant 0 : index
    %12 = vector.load %arg4[%c0_9, %c0_10] : memref<16x32xf32, #tpu.memory_space<vmem>>, vector<16x32xf32>
    %13 = tpu.concatenate %12, %11 in 1 : vector<16x32xf32>, vector<16x32xf32> -> vector<16x64xf32>
    %cst_11 = arith.constant dense<0.000000e+00> : vector<16x32xf32>
    %14 = tpu.matmul %13, %2, %cst_11 {dimension_numbers = #tpu.dot_dimension_numbers<[1], [0], [0], [1], [0, 0, 1, 1], [], []>} : vector<16x64xf32>, vector<64x32xf32>, vector<16x32xf32> -> vector<16x32xf32>
    %15 = arith.mulf %14, %14 : vector<16x32xf32>
    %cst_12 = arith.constant dense<0.000000e+00> : vector<16xf32>
    %16 = vector.multi_reduction <add>, %15, %cst_12 [1] : vector<16x32xf32> to vector<16xf32>
    %17 = vector.shape_cast %16 : vector<16xf32> to vector<16x1xf32>
    %cst_13 = arith.constant 9.99999996E-13 : f32
    %18 = vector.broadcast %cst_13 : f32 to vector<16x1xf32>
    %19 = arith.maximumf %17, %18 : vector<16x1xf32>
    %20 = math.rsqrt %19 : vector<16x1xf32>
    %21 = vector.broadcast %20 : vector<16x1xf32> to vector<16x32xf32>
    %22 = arith.mulf %14, %21 : vector<16x32xf32>
    %23 = tpu.concatenate %22, %3 in 0 : vector<16x32xf32>, vector<16x32xf32> -> vector<32x32xf32>
    %cst_14 = arith.constant dense<0.000000e+00> : vector<16x32xf32>
    %24 = tpu.matmul %22, %23, %cst_14 {dimension_numbers = #tpu.dot_dimension_numbers<[1], [1], [0], [0], [0, 0, 1, 0], [], []>} : vector<16x32xf32>, vector<32x32xf32>, vector<16x32xf32> -> vector<16x32xf32>
    %c0_15 = arith.constant 0 : index
    %c0_16 = arith.constant 0 : index
    %25 = vector.load %arg2[%c0_15, %c0_16] : memref<11x32xf32, #tpu.memory_space<vmem>>, vector<11x32xf32>
    %cst_17 = arith.constant 0.000000e+00 : f32
    %26 = vector.broadcast %cst_17 : f32 to vector<16x32xf32>
    %cst_18 = arith.constant 1.000000e+00 : f32
    %27 = vector.broadcast %cst_18 : f32 to vector<16x32xf32>
    %28 = arith.subf %24, %27 : vector<16x32xf32>
    %29 = arith.mulf %28, %28 : vector<16x32xf32>
    %cst_19 = arith.constant -5.000000e+05 : f32
    %30 = vector.broadcast %cst_19 : f32 to vector<16x32xf32>
    %31 = arith.mulf %29, %30 : vector<16x32xf32>
    %32 = math.exp %31 : vector<16x32xf32>
    %33 = vector.extract_strided_slice %25 {offsets = [0, 0], sizes = [1, 32], strides = [1, 1]} : vector<11x32xf32> to vector<1x32xf32>
    %34 = vector.broadcast %33 : vector<1x32xf32> to vector<16x32xf32>
    %35 = arith.mulf %32, %34 : vector<16x32xf32>
    %36 = arith.addf %26, %35 : vector<16x32xf32>
    %cst_20 = arith.constant -0.899999976 : f32
    %37 = vector.broadcast %cst_20 : f32 to vector<16x32xf32>
    %38 = arith.subf %24, %37 : vector<16x32xf32>
    %39 = arith.mulf %38, %38 : vector<16x32xf32>
    %cst_21 = arith.constant -5.000000e+01 : f32
    %40 = vector.broadcast %cst_21 : f32 to vector<16x32xf32>
    %41 = arith.mulf %39, %40 : vector<16x32xf32>
    %42 = math.exp %41 : vector<16x32xf32>
    %43 = vector.extract_strided_slice %25 {offsets = [1, 0], sizes = [1, 32], strides = [1, 1]} : vector<11x32xf32> to vector<1x32xf32>
    %44 = vector.broadcast %43 : vector<1x32xf32> to vector<16x32xf32>
    %45 = arith.mulf %42, %44 : vector<16x32xf32>
    %46 = arith.addf %36, %45 : vector<16x32xf32>
    %cst_22 = arith.constant -0.699999988 : f32
    %47 = vector.broadcast %cst_22 : f32 to vector<16x32xf32>
    %48 = arith.subf %24, %47 : vector<16x32xf32>
    %49 = arith.mulf %48, %48 : vector<16x32xf32>
    %cst_23 = arith.constant -5.000000e+01 : f32
    %50 = vector.broadcast %cst_23 : f32 to vector<16x32xf32>
    %51 = arith.mulf %49, %50 : vector<16x32xf32>
    %52 = math.exp %51 : vector<16x32xf32>
    %53 = vector.extract_strided_slice %25 {offsets = [2, 0], sizes = [1, 32], strides = [1, 1]} : vector<11x32xf32> to vector<1x32xf32>
    %54 = vector.broadcast %53 : vector<1x32xf32> to vector<16x32xf32>
    %55 = arith.mulf %52, %54 : vector<16x32xf32>
    %56 = arith.addf %46, %55 : vector<16x32xf32>
    %cst_24 = arith.constant -5.000000e-01 : f32
    %57 = vector.broadcast %cst_24 : f32 to vector<16x32xf32>
    %58 = arith.subf %24, %57 : vector<16x32xf32>
    %59 = arith.mulf %58, %58 : vector<16x32xf32>
    %cst_25 = arith.constant -5.000000e+01 : f32
    %60 = vector.broadcast %cst_25 : f32 to vector<16x32xf32>
    %61 = arith.mulf %59, %60 : vector<16x32xf32>
    %62 = math.exp %61 : vector<16x32xf32>
    %63 = vector.extract_strided_slice %25 {offsets = [3, 0], sizes = [1, 32], strides = [1, 1]} : vector<11x32xf32> to vector<1x32xf32>
    %64 = vector.broadcast %63 : vector<1x32xf32> to vector<16x32xf32>
    %65 = arith.mulf %62, %64 : vector<16x32xf32>
    %66 = arith.addf %56, %65 : vector<16x32xf32>
    %cst_26 = arith.constant -3.000000e-01 : f32
    %67 = vector.broadcast %cst_26 : f32 to vector<16x32xf32>
    %68 = arith.subf %24, %67 : vector<16x32xf32>
    %69 = arith.mulf %68, %68 : vector<16x32xf32>
    %cst_27 = arith.constant -5.000000e+01 : f32
    %70 = vector.broadcast %cst_27 : f32 to vector<16x32xf32>
    %71 = arith.mulf %69, %70 : vector<16x32xf32>
    %72 = math.exp %71 : vector<16x32xf32>
    %73 = vector.extract_strided_slice %25 {offsets = [4, 0], sizes = [1, 32], strides = [1, 1]} : vector<11x32xf32> to vector<1x32xf32>
    %74 = vector.broadcast %73 : vector<1x32xf32> to vector<16x32xf32>
    %75 = arith.mulf %72, %74 : vector<16x32xf32>
    %76 = arith.addf %66, %75 : vector<16x32xf32>
    %cst_28 = arith.constant -1.000000e-01 : f32
    %77 = vector.broadcast %cst_28 : f32 to vector<16x32xf32>
    %78 = arith.subf %24, %77 : vector<16x32xf32>
    %79 = arith.mulf %78, %78 : vector<16x32xf32>
    %cst_29 = arith.constant -5.000000e+01 : f32
    %80 = vector.broadcast %cst_29 : f32 to vector<16x32xf32>
    %81 = arith.mulf %79, %80 : vector<16x32xf32>
    %82 = math.exp %81 : vector<16x32xf32>
    %83 = vector.extract_strided_slice %25 {offsets = [5, 0], sizes = [1, 32], strides = [1, 1]} : vector<11x32xf32> to vector<1x32xf32>
    %84 = vector.broadcast %83 : vector<1x32xf32> to vector<16x32xf32>
    %85 = arith.mulf %82, %84 : vector<16x32xf32>
    %86 = arith.addf %76, %85 : vector<16x32xf32>
    %cst_30 = arith.constant 1.000000e-01 : f32
    %87 = vector.broadcast %cst_30 : f32 to vector<16x32xf32>
    %88 = arith.subf %24, %87 : vector<16x32xf32>
    %89 = arith.mulf %88, %88 : vector<16x32xf32>
    %cst_31 = arith.constant -5.000000e+01 : f32
    %90 = vector.broadcast %cst_31 : f32 to vector<16x32xf32>
    %91 = arith.mulf %89, %90 : vector<16x32xf32>
    %92 = math.exp %91 : vector<16x32xf32>
    %93 = vector.extract_strided_slice %25 {offsets = [6, 0], sizes = [1, 32], strides = [1, 1]} : vector<11x32xf32> to vector<1x32xf32>
    %94 = vector.broadcast %93 : vector<1x32xf32> to vector<16x32xf32>
    %95 = arith.mulf %92, %94 : vector<16x32xf32>
    %96 = arith.addf %86, %95 : vector<16x32xf32>
    %cst_32 = arith.constant 3.000000e-01 : f32
    %97 = vector.broadcast %cst_32 : f32 to vector<16x32xf32>
    %98 = arith.subf %24, %97 : vector<16x32xf32>
    %99 = arith.mulf %98, %98 : vector<16x32xf32>
    %cst_33 = arith.constant -5.000000e+01 : f32
    %100 = vector.broadcast %cst_33 : f32 to vector<16x32xf32>
    %101 = arith.mulf %99, %100 : vector<16x32xf32>
    %102 = math.exp %101 : vector<16x32xf32>
    %103 = vector.extract_strided_slice %25 {offsets = [7, 0], sizes = [1, 32], strides = [1, 1]} : vector<11x32xf32> to vector<1x32xf32>
    %104 = vector.broadcast %103 : vector<1x32xf32> to vector<16x32xf32>
    %105 = arith.mulf %102, %104 : vector<16x32xf32>
    %106 = arith.addf %96, %105 : vector<16x32xf32>
    %cst_34 = arith.constant 5.000000e-01 : f32
    %107 = vector.broadcast %cst_34 : f32 to vector<16x32xf32>
    %108 = arith.subf %24, %107 : vector<16x32xf32>
    %109 = arith.mulf %108, %108 : vector<16x32xf32>
    %cst_35 = arith.constant -5.000000e+01 : f32
    %110 = vector.broadcast %cst_35 : f32 to vector<16x32xf32>
    %111 = arith.mulf %109, %110 : vector<16x32xf32>
    %112 = math.exp %111 : vector<16x32xf32>
    %113 = vector.extract_strided_slice %25 {offsets = [8, 0], sizes = [1, 32], strides = [1, 1]} : vector<11x32xf32> to vector<1x32xf32>
    %114 = vector.broadcast %113 : vector<1x32xf32> to vector<16x32xf32>
    %115 = arith.mulf %112, %114 : vector<16x32xf32>
    %116 = arith.addf %106, %115 : vector<16x32xf32>
    %cst_36 = arith.constant 0.699999988 : f32
    %117 = vector.broadcast %cst_36 : f32 to vector<16x32xf32>
    %118 = arith.subf %24, %117 : vector<16x32xf32>
    %119 = arith.mulf %118, %118 : vector<16x32xf32>
    %cst_37 = arith.constant -5.000000e+01 : f32
    %120 = vector.broadcast %cst_37 : f32 to vector<16x32xf32>
    %121 = arith.mulf %119, %120 : vector<16x32xf32>
    %122 = math.exp %121 : vector<16x32xf32>
    %123 = vector.extract_strided_slice %25 {offsets = [9, 0], sizes = [1, 32], strides = [1, 1]} : vector<11x32xf32> to vector<1x32xf32>
    %124 = vector.broadcast %123 : vector<1x32xf32> to vector<16x32xf32>
    %125 = arith.mulf %122, %124 : vector<16x32xf32>
    %126 = arith.addf %116, %125 : vector<16x32xf32>
    %cst_38 = arith.constant 0.899999976 : f32
    %127 = vector.broadcast %cst_38 : f32 to vector<16x32xf32>
    %128 = arith.subf %24, %127 : vector<16x32xf32>
    %129 = arith.mulf %128, %128 : vector<16x32xf32>
    %cst_39 = arith.constant -5.000000e+01 : f32
    %130 = vector.broadcast %cst_39 : f32 to vector<16x32xf32>
    %131 = arith.mulf %129, %130 : vector<16x32xf32>
    %132 = math.exp %131 : vector<16x32xf32>
    %133 = vector.extract_strided_slice %25 {offsets = [10, 0], sizes = [1, 32], strides = [1, 1]} : vector<11x32xf32> to vector<1x32xf32>
    %134 = vector.broadcast %133 : vector<1x32xf32> to vector<16x32xf32>
    %135 = arith.mulf %132, %134 : vector<16x32xf32>
    %136 = arith.addf %126, %135 : vector<16x32xf32>
    %cst_40 = arith.constant dense<0.000000e+00> : vector<16xf32>
    %137 = vector.multi_reduction <add>, %136, %cst_40 [1] : vector<16x32xf32> to vector<16xf32>
    %138 = vector.shape_cast %137 : vector<16xf32> to vector<16x1xf32>
    %c0_41 = arith.constant 0 : index
    %139 = memref.load %arg0[%c0_41] : memref<1xf32, #tpu.memory_space<smem>>
    %140 = vector.broadcast %139 : f32 to vector<16x1xf32>
    %141 = arith.addf %138, %140 : vector<16x1xf32>
    %142 = math.tanh %141 : vector<16x1xf32>
    %c0_42 = arith.constant 0 : index
    %c0_43 = arith.constant 0 : index
    %143 = vector.load %arg5[%c0_42, %c0_43] : memref<16x1xf32, #tpu.memory_space<vmem>>, vector<16x1xf32>
    tpu.vector_store %arg5[%c0_42, %c0_43], %142 {strides = array<i32>} : memref<16x1xf32, #tpu.memory_space<vmem>>, vector<16x1xf32>,
    return
  }
}

</mosaic_0001>

<llo_original>
// kernel: kesm_forward.1
$region0: #{kesm_forward.1}
  #allocation0 [shape = 'u32[]', space=smem, size = 0x4, offset = 0x4, fixed_abs, tag = 'smem constant byte address 0x4 - core index']
  #allocation1 [shape = 'u32[144,128]{1,0:T(1,128)}', space=vmem, size = 0x12000, scoped, tag = 'internal scratch']
  #allocation2 [shape = 'f32[1]{0:T(128)S(6)}', space=smem, size = 0x200, scoped, tag = 'scoped memory for kesm_forward.1']
  %s0 = inlined_call_operand.<no memory space> [shape: f32[1], index: 0, kind: input, shape index: {}]
  %s1 = inlined_call_operand.vmem [shape: f32[184,32], index: 1, kind: input, shape index: {}]
  %s2 = inlined_call_operand.vmem [shape: f32[11,32], index: 2, kind: input, shape index: {}]
  %s3 = inlined_call_operand.vmem [shape: f32[16,6,96], index: 3, kind: input, shape index: {}]
  %s4 = inlined_call_operand.vmem [shape: f32[16,32], index: 4, kind: input, shape index: {}]
  %s5 = inlined_call_operand.vmem [shape: f32[16,1], index: 5, kind: output, shape index: {}]
  %s6 = sld [smem:[#allocation0]]
  $region30: #{kesm_forward.1} parent=0
    _
  %s8 = ssub.s32 1, %s6
  %s9 = scalar_select 0, %s8, %s6
  %10 = sst [smem:[#allocation2]] %s0
  // Predicated region
  $region2: #{kesm_forward.1} parent=0 // pred_check
    _
  $region3: #{kesm_forward.1} parent=0 // pred_check_branch
    %12 = sbr.rel (0) target = $region5
  $region4: #{kesm_forward.1} parent=0 // pred_region
    _
  $region5: #{kesm_forward.1} parent=0 // pred_fallthru
    _
  // Predicated region
  $region6: #{kesm_forward.1} parent=0 // pred_check
    _
  $region7: #{kesm_forward.1} parent=0 // pred_check_branch
    %14 = sbr.rel (0) target = $region9
  $region8: #{kesm_forward.1} parent=0 // pred_region
    _
  $region9: #{kesm_forward.1} parent=0 // pred_fallthru
    _
  // Predicated region
  $region10: #{kesm_forward.1} parent=0 // pred_check
    _
  $region11: #{kesm_forward.1} parent=0 // pred_check_branch
    %16 = sbr.rel (0) target = $region13
  $region12: #{kesm_forward.1} parent=0 // pred_region
    _
  $region13: #{kesm_forward.1} parent=0 // pred_fallthru
    _
  // Predicated region
  $region14: #{kesm_forward.1} parent=0 // pred_check
    _
  $region15: #{kesm_forward.1} parent=0 // pred_check_branch
    %18 = sbr.rel (0) target = $region17
  $region16: #{kesm_forward.1} parent=0 // pred_region
    _
  $region17: #{kesm_forward.1} parent=0 // pred_fallthru
    _
  // Predicated region
  $region18: #{kesm_forward.1} parent=0 // pred_check
    _
  $region19: #{kesm_forward.1} parent=0 // pred_check_branch
    %20 = sbr.rel (0) target = $region21
  $region20: #{kesm_forward.1} parent=0 // pred_region
    _
  $region21: #{kesm_forward.1} parent=0 // pred_fallthru
    _
  %v21 = vld [vmem:[%s1] sm:$0xff]
  %v22 = vld [vmem:[%s1 + $0x8] sm:$0xff]
  %v23 = vld [vmem:[%s1 + $0x10] sm:$0xff]
  %v24 = vld [vmem:[%s1 + $0x18] sm:$0xff]
  %v25 = vld [vmem:[%s1 + $0x20] sm:$0xff]
  %v26 = vld [vmem:[%s1 + $0x28] sm:$0xff]
  %v27 = vld [vmem:[%s1 + $0x30] sm:$0xff]
  %v28 = vld [vmem:[%s1 + $0x38] sm:$0xff]
  %v29 = vld [vmem:[%s1 + $0x40] sm:$0xff]
  %v30 = vld [vmem:[%s1 + $0x48] sm:$0xff]
  %v31 = vld [vmem:[%s1 + $0x50] sm:$0xff]
  %v32 = vld [vmem:[%s1 + $0x58] sm:$0xff]
  %v33 = vld [vmem:[%s1 + $0x60] sm:$0x1]
  %v34 = vld [vmem:[%s1 + $0x68] sm:$0xff]
  %v35 = vld [vmem:[%s1 + $0x70] sm:$0xff]
  %v36 = vld [vmem:[%s1 + $0x78] sm:$0xff]
  %v37 = vld [vmem:[%s1 + $0x80] sm:$0xff]
  %v38 = vld [vmem:[%s1 + $0x88] sm:$0xff]
  %v39 = vld [vmem:[%s1 + $0x90] sm:$0xff]
  %v40 = vld [vmem:[%s1 + $0x98] sm:$0xff]
  %v41 = vld [vmem:[%s1 + $0xa0] sm:$0xff]
  %v42 = vld [vmem:[%s1 + $0xa8] sm:$0xff]
  %v43 = vld [vmem:[%s1 + $0xb0] sm:$0xff]
  %v44 = vld [vmem:[%s3] sm:$0x3f]
  %v45 = vld [vmem:[%s3 + $0x8] sm:$0x3f]
  %v46 = vld [vmem:[%s3 + $0x10] sm:$0x3f]
  %v47 = vld [vmem:[%s3 + $0x18] sm:$0x3f]
  %v48 = vld [vmem:[%s3 + $0x20] sm:$0x3f]
  %v49 = vld [vmem:[%s3 + $0x28] sm:$0x3f]
  %v50 = vld [vmem:[%s3 + $0x30] sm:$0x3f]
  %v51 = vld [vmem:[%s3 + $0x38] sm:$0x3f]
  %v52 = vld [vmem:[%s3 + $0x40] sm:$0x3f]
  %v53 = vld [vmem:[%s3 + $0x48] sm:$0x3f]
  %v54 = vld [vmem:[%s3 + $0x50] sm:$0x3f]
  %v55 = vld [vmem:[%s3 + $0x58] sm:$0x3f]
  %v56 = vld [vmem:[%s3 + $0x60] sm:$0x3f]
  %v57 = vld [vmem:[%s3 + $0x68] sm:$0x3f]
  %v58 = vld [vmem:[%s3 + $0x70] sm:$0x3f]
  %v59 = vld [vmem:[%s3 + $0x78] sm:$0x3f]
  %v60 = vlaneseq
  %v61 = vshrl.u32 %v60, 7
  %v62 = vsub.s32 0, %v61
  %v63 = vrot.slane %v33, %v62
  %v80 = vcombine.high %v44, %v44
  %v82 = vunpack.c.l.s4 1983009808
  %v83 = vunpack.c.0.s8 %v82
  %v84 = vlaneseq
  %v85 = vshrl.u32 %v84, 7
  %v86 = vsub.s32 %v83, %v85
  %v87 = vrot.slane %v44, %v86
  %v89 = vunpack.c.l.s4 1983009808
  %v90 = vunpack.c.0.s8 %v89
  %v91 = vlaneseq
  %v92 = vshrl.u32 %v91, 7
  %v93 = vsub.s32 %v90, %v92
  %v94 = vrot.slane %v80, %v93
  %v95 = vcombine.high %v87, %v87
  %v96 = vcombine.high %v45, %v45
  %v98 = vunpack.c.l.s4 1983009808
  %v99 = vunpack.c.0.s8 %v98
  %v100 = vlaneseq
  %v101 = vshrl.u32 %v100, 7
  %v102 = vsub.s32 %v99, %v101
  %v103 = vrot.slane %v45, %v102
  %v105 = vunpack.c.l.s4 1983009808
  %v106 = vunpack.c.0.s8 %v105
  %v107 = vlaneseq
  %v108 = vshrl.u32 %v107, 7
  %v109 = vsub.s32 %v106, %v108
  %v110 = vrot.slane %v96, %v109
  %v111 = vcombine.high %v103, %v103
  %v112 = vcombine.high %v46, %v46
  %v114 = vunpack.c.l.s4 1983009808
  %v115 = vunpack.c.0.s8 %v114
  %v116 = vlaneseq
  %v117 = vshrl.u32 %v116, 7
  %v118 = vsub.s32 %v115, %v117
  %v119 = vrot.slane %v46, %v118
  %v121 = vunpack.c.l.s4 1983009808
  %v122 = vunpack.c.0.s8 %v121
  %v123 = vlaneseq
  %v124 = vshrl.u32 %v123, 7
  %v125 = vsub.s32 %v122, %v124
  %v126 = vrot.slane %v112, %v125
  %v127 = vcombine.high %v119, %v119
  %v128 = vcombine.high %v47, %v47
  %v130 = vunpack.c.l.s4 1983009808
  %v131 = vunpack.c.0.s8 %v130
  %v132 = vlaneseq
  %v133 = vshrl.u32 %v132, 7
  %v134 = vsub.s32 %v131, %v133
  %v135 = vrot.slane %v47, %v134
  %v137 = vunpack.c.l.s4 1983009808
  %v138 = vunpack.c.0.s8 %v137
  %v139 = vlaneseq
  %v140 = vshrl.u32 %v139, 7
  %v141 = vsub.s32 %v138, %v140
  %v142 = vrot.slane %v128, %v141
  %v143 = vcombine.high %v135, %v135
  %v144 = vcombine.high %v48, %v48
  %v146 = vunpack.c.l.s4 1983009808
  %v147 = vunpack.c.0.s8 %v146
  %v148 = vlaneseq
  %v149 = vshrl.u32 %v148, 7
  %v150 = vsub.s32 %v147, %v149
  %v151 = vrot.slane %v48, %v150
  %v153 = vunpack.c.l.s4 1983009808
  %v154 = vunpack.c.0.s8 %v153
  %v155 = vlaneseq
  %v156 = vshrl.u32 %v155, 7
  %v157 = vsub.s32 %v154, %v156
  %v158 = vrot.slane %v144, %v157
  %v159 = vcombine.high %v151, %v151
  %v160 = vcombine.high %v49, %v49
  %v162 = vunpack.c.l.s4 1983009808
  %v163 = vunpack.c.0.s8 %v162
  %v164 = vlaneseq
  %v165 = vshrl.u32 %v164, 7
  %v166 = vsub.s32 %v163, %v165
  %v167 = vrot.slane %v49, %v166
  %v169 = vunpack.c.l.s4 1983009808
  %v170 = vunpack.c.0.s8 %v169
  %v171 = vlaneseq
  %v172 = vshrl.u32 %v171, 7
  %v173 = vsub.s32 %v170, %v172
  %v174 = vrot.slane %v160, %v173
  %v175 = vcombine.high %v167, %v167
  %v176 = vcombine.high %v50, %v50
  %v178 = vunpack.c.l.s4 1983009808
  %v179 = vunpack.c.0.s8 %v178
  %v180 = vlaneseq
  %v181 = vshrl.u32 %v180, 7
  %v182 = vsub.s32 %v179, %v181
  %v183 = vrot.slane %v50, %v182
  %v185 = vunpack.c.l.s4 1983009808
  %v186 = vunpack.c.0.s8 %v185
  %v187 = vlaneseq
  %v188 = vshrl.u32 %v187, 7
  %v189 = vsub.s32 %v186, %v188
  %v190 = vrot.slane %v176, %v189
  %v191 = vcombine.high %v183, %v183
  %v192 = vcombine.high %v51, %v51
  %v194 = vunpack.c.l.s4 1983009808
  %v195 = vunpack.c.0.s8 %v194
  %v196 = vlaneseq
  %v197 = vshrl.u32 %v196, 7
  %v198 = vsub.s32 %v195, %v197
  %v199 = vrot.slane %v51, %v198
  %v201 = vunpack.c.l.s4 1983009808
  %v202 = vunpack.c.0.s8 %v201
  %v203 = vlaneseq
  %v204 = vshrl.u32 %v203, 7
  %v205 = vsub.s32 %v202, %v204
  %v206 = vrot.slane %v192, %v205
  %v207 = vcombine.high %v199, %v199
  %v208 = vcombine.high %v52, %v52
  %v210 = vunpack.c.l.s4 1983009808
  %v211 = vunpack.c.0.s8 %v210
  %v212 = vlaneseq
  %v213 = vshrl.u32 %v212, 7
  %v214 = vsub.s32 %v211, %v213
  %v215 = vrot.slane %v52, %v214
  %v217 = vunpack.c.l.s4 1983009808
  %v218 = vunpack.c.0.s8 %v217
  %v219 = vlaneseq
  %v220 = vshrl.u32 %v219, 7
  %v221 = vsub.s32 %v218, %v220
  %v222 = vrot.slane %v208, %v221
  %v223 = vcombine.high %v215, %v215
  %v224 = vcombine.high %v53, %v53
  %v226 = vunpack.c.l.s4 1983009808
  %v227 = vunpack.c.0.s8 %v226
  %v228 = vlaneseq
  %v229 = vshrl.u32 %v228, 7
  %v230 = vsub.s32 %v227, %v229
  %v231 = vrot.slane %v53, %v230
  %v233 = vunpack.c.l.s4 1983009808
  %v234 = vunpack.c.0.s8 %v233
  %v235 = vlaneseq
  %v236 = vshrl.u32 %v235, 7
  %v237 = vsub.s32 %v234, %v236
  %v238 = vrot.slane %v224, %v237
  %v239 = vcombine.high %v231, %v231
  %v240 = vcombine.high %v54, %v54
  %v242 = vunpack.c.l.s4 1983009808
  %v243 = vunpack.c.0.s8 %v242
  %v244 = vlaneseq
  %v245 = vshrl.u32 %v244, 7
  %v246 = vsub.s32 %v243, %v245
  %v247 = vrot.slane %v54, %v246
  %v249 = vunpack.c.l.s4 1983009808
  %v250 = vunpack.c.0.s8 %v249
  %v251 = vlaneseq
  %v252 = vshrl.u32 %v251, 7
  %v253 = vsub.s32 %v250, %v252
  %v254 = vrot.slane %v240, %v253
  %v255 = vcombine.high %v247, %v247
  %v256 = vcombine.high %v55, %v55
  %v258 = vunpack.c.l.s4 1983009808
  %v259 = vunpack.c.0.s8 %v258
  %v260 = vlaneseq
  %v261 = vshrl.u32 %v260, 7
  %v262 = vsub.s32 %v259, %v261
  %v263 = vrot.slane %v55, %v262
  %v265 = vunpack.c.l.s4 1983009808
  %v266 = vunpack.c.0.s8 %v265
  %v267 = vlaneseq
  %v268 = vshrl.u32 %v267, 7
  %v269 = vsub.s32 %v266, %v268
  %v270 = vrot.slane %v256, %v269
  %v271 = vcombine.high %v263, %v263
  %v272 = vcombine.high %v56, %v56
  %v274 = vunpack.c.l.s4 1983009808
  %v275 = vunpack.c.0.s8 %v274
  %v276 = vlaneseq
  %v277 = vshrl.u32 %v276, 7
  %v278 = vsub.s32 %v275, %v277
  %v279 = vrot.slane %v56, %v278
  %v281 = vunpack.c.l.s4 1983009808
  %v282 = vunpack.c.0.s8 %v281
  %v283 = vlaneseq
  %v284 = vshrl.u32 %v283, 7
  %v285 = vsub.s32 %v282, %v284
  %v286 = vrot.slane %v272, %v285
  %v287 = vcombine.high %v279, %v279
  %v288 = vcombine.high %v57, %v57
  %v290 = vunpack.c.l.s4 1983009808
  %v291 = vunpack.c.0.s8 %v290
  %v292 = vlaneseq
  %v293 = vshrl.u32 %v292, 7
  %v294 = vsub.s32 %v291, %v293
  %v295 = vrot.slane %v57, %v294
  %v297 = vunpack.c.l.s4 1983009808
  %v298 = vunpack.c.0.s8 %v297
  %v299 = vlaneseq
  %v300 = vshrl.u32 %v299, 7
  %v301 = vsub.s32 %v298, %v300
  %v302 = vrot.slane %v288, %v301
  %v303 = vcombine.high %v295, %v295
  %v304 = vcombine.high %v58, %v58
  %v306 = vunpack.c.l.s4 1983009808
  %v307 = vunpack.c.0.s8 %v306
  %v308 = vlaneseq
  %v309 = vshrl.u32 %v308, 7
  %v310 = vsub.s32 %v307, %v309
  %v311 = vrot.slane %v58, %v310
  %v313 = vunpack.c.l.s4 1983009808
  %v314 = vunpack.c.0.s8 %v313
  %v315 = vlaneseq
  %v316 = vshrl.u32 %v315, 7
  %v317 = vsub.s32 %v314, %v316
  %v318 = vrot.slane %v304, %v317
  %v319 = vcombine.high %v311, %v311
  %v320 = vcombine.high %v59, %v59
  %v322 = vunpack.c.l.s4 1983009808
  %v323 = vunpack.c.0.s8 %v322
  %v324 = vlaneseq
  %v325 = vshrl.u32 %v324, 7
  %v326 = vsub.s32 %v323, %v325
  %v327 = vrot.slane %v59, %v326
  %v329 = vunpack.c.l.s4 1983009808
  %v330 = vunpack.c.0.s8 %v329
  %v331 = vlaneseq
  %v332 = vshrl.u32 %v331, 7
  %v333 = vsub.s32 %v330, %v332
  %v334 = vrot.slane %v320, %v333
  %v335 = vcombine.high %v327, %v327
  %v337 = vcombine.high %v63, %v63
  %v339 = vunpack.c.l.s4 1983009808
  %v340 = vunpack.c.0.s8 %v339
  %v341 = vlaneseq
  %v342 = vshrl.u32 %v341, 7
  %v343 = vsub.s32 %v340, %v342
  %v344 = vrot.slane %v63, %v343
  %v346 = vunpack.c.l.s4 1983009808
  %v347 = vunpack.c.0.s8 %v346
  %v348 = vlaneseq
  %v349 = vshrl.u32 %v348, 7
  %v350 = vsub.s32 %v347, %v349
  %v351 = vrot.slane %v337, %v350
  %v352 = vcombine.high %v344, %v344
  %v353 = vcombine.low %v87, %v95
  %v354 = vcombine.low %v94, %v103
  %v356 = vunpack.c.l.s4 1983009808
  %v357 = vunpack.c.0.s8 %v356
  %v358 = vlaneseq
  %v359 = vshrl.u32 %v358, 7
  %v360 = vsub.s32 %v357, %v359
  %v361 = vrot.slane %v353, %v360
  %v363 = vunpack.c.l.s4 1983009808
  %v364 = vunpack.c.0.s8 %v363
  %v365 = vlaneseq
  %v366 = vshrl.u32 %v365, 7
  %v367 = vsub.s32 %v364, %v366
  %v368 = vrot.slane %v354, %v367
  %v369 = vcombine.low %v361, %v368
  %v370 = vcombine.low %v111, %v110
  %v371 = vcombine.low %v119, %v127
  %v373 = vunpack.c.l.s4 1983009808
  %v374 = vunpack.c.0.s8 %v373
  %v375 = vlaneseq
  %v376 = vshrl.u32 %v375, 7
  %v377 = vsub.s32 %v374, %v376
  %v378 = vrot.slane %v370, %v377
  %v380 = vunpack.c.l.s4 1983009808
  %v381 = vunpack.c.0.s8 %v380
  %v382 = vlaneseq
  %v383 = vshrl.u32 %v382, 7
  %v384 = vsub.s32 %v381, %v383
  %v385 = vrot.slane %v371, %v384
  %v386 = vcombine.low %v378, %v385
  %v387 = vcombine.low %v126, %v135
  %v388 = vcombine.low %v143, %v142
  %v390 = vunpack.c.l.s4 1983009808
  %v391 = vunpack.c.0.s8 %v390
  %v392 = vlaneseq
  %v393 = vshrl.u32 %v392, 7
  %v394 = vsub.s32 %v391, %v393
  %v395 = vrot.slane %v387, %v394
  %v397 = vunpack.c.l.s4 1983009808
  %v398 = vunpack.c.0.s8 %v397
  %v399 = vlaneseq
  %v400 = vshrl.u32 %v399, 7
  %v401 = vsub.s32 %v398, %v400
  %v402 = vrot.slane %v388, %v401
  %v403 = vcombine.low %v395, %v402
  %v404 = vcombine.low %v151, %v159
  %v405 = vcombine.low %v158, %v167
  %v407 = vunpack.c.l.s4 1983009808
  %v408 = vunpack.c.0.s8 %v407
  %v409 = vlaneseq
  %v410 = vshrl.u32 %v409, 7
  %v411 = vsub.s32 %v408, %v410
  %v412 = vrot.slane %v404, %v411
  %v414 = vunpack.c.l.s4 1983009808
  %v415 = vunpack.c.0.s8 %v414
  %v416 = vlaneseq
  %v417 = vshrl.u32 %v416, 7
  %v418 = vsub.s32 %v415, %v417
  %v419 = vrot.slane %v405, %v418
  %v420 = vcombine.low %v412, %v419
  %v421 = vcombine.low %v175, %v174
  %v422 = vcombine.low %v183, %v191
  %v424 = vunpack.c.l.s4 1983009808
  %v425 = vunpack.c.0.s8 %v424
  %v426 = vlaneseq
  %v427 = vshrl.u32 %v426, 7
  %v428 = vsub.s32 %v425, %v427
  %v429 = vrot.slane %v421, %v428
  %v431 = vunpack.c.l.s4 1983009808
  %v432 = vunpack.c.0.s8 %v431
  %v433 = vlaneseq
  %v434 = vshrl.u32 %v433, 7
  %v435 = vsub.s32 %v432, %v434
  %v436 = vrot.slane %v422, %v435
  %v437 = vcombine.low %v429, %v436
  %v438 = vcombine.low %v190, %v199
  %v439 = vcombine.low %v207, %v206
  %v441 = vunpack.c.l.s4 1983009808
  %v442 = vunpack.c.0.s8 %v441
  %v443 = vlaneseq
  %v444 = vshrl.u32 %v443, 7
  %v445 = vsub.s32 %v442, %v444
  %v446 = vrot.slane %v438, %v445
  %v448 = vunpack.c.l.s4 1983009808
  %v449 = vunpack.c.0.s8 %v448
  %v450 = vlaneseq
  %v451 = vshrl.u32 %v450, 7
  %v452 = vsub.s32 %v449, %v451
  %v453 = vrot.slane %v439, %v452
  %v454 = vcombine.low %v446, %v453
  %v455 = vcombine.low %v215, %v223
  %v456 = vcombine.low %v222, %v231
  %v458 = vunpack.c.l.s4 1983009808
  %v459 = vunpack.c.0.s8 %v458
  %v460 = vlaneseq
  %v461 = vshrl.u32 %v460, 7
  %v462 = vsub.s32 %v459, %v461
  %v463 = vrot.slane %v455, %v462
  %v465 = vunpack.c.l.s4 1983009808
  %v466 = vunpack.c.0.s8 %v465
  %v467 = vlaneseq
  %v468 = vshrl.u32 %v467, 7
  %v469 = vsub.s32 %v466, %v468
  %v470 = vrot.slane %v456, %v469
  %v471 = vcombine.low %v463, %v470
  %v472 = vcombine.low %v239, %v238
  %v473 = vcombine.low %v247, %v255
  %v475 = vunpack.c.l.s4 1983009808
  %v476 = vunpack.c.0.s8 %v475
  %v477 = vlaneseq
  %v478 = vshrl.u32 %v477, 7
  %v479 = vsub.s32 %v476, %v478
  %v480 = vrot.slane %v472, %v479
  %v482 = vunpack.c.l.s4 1983009808
  %v483 = vunpack.c.0.s8 %v482
  %v484 = vlaneseq
  %v485 = vshrl.u32 %v484, 7
  %v486 = vsub.s32 %v483, %v485
  %v487 = vrot.slane %v473, %v486
  %v488 = vcombine.low %v480, %v487
  %v489 = vcombine.low %v254, %v263
  %v490 = vcombine.low %v271, %v270
  %v492 = vunpack.c.l.s4 1983009808
  %v493 = vunpack.c.0.s8 %v492
  %v494 = vlaneseq
  %v495 = vshrl.u32 %v494, 7
  %v496 = vsub.s32 %v493, %v495
  %v497 = vrot.slane %v489, %v496
  %v499 = vunpack.c.l.s4 1983009808
  %v500 = vunpack.c.0.s8 %v499
  %v501 = vlaneseq
  %v502 = vshrl.u32 %v501, 7
  %v503 = vsub.s32 %v500, %v502
  %v504 = vrot.slane %v490, %v503
  %v505 = vcombine.low %v497, %v504
  %v506 = vcombine.low %v279, %v287
  %v507 = vcombine.low %v286, %v295
  %v509 = vunpack.c.l.s4 1983009808
  %v510 = vunpack.c.0.s8 %v509
  %v511 = vlaneseq
  %v512 = vshrl.u32 %v511, 7
  %v513 = vsub.s32 %v510, %v512
  %v514 = vrot.slane %v506, %v513
  %v516 = vunpack.c.l.s4 1983009808
  %v517 = vunpack.c.0.s8 %v516
  %v518 = vlaneseq
  %v519 = vshrl.u32 %v518, 7
  %v520 = vsub.s32 %v517, %v519
  %v521 = vrot.slane %v507, %v520
  %v522 = vcombine.low %v514, %v521
  %v523 = vcombine.low %v303, %v302
  %v524 = vcombine.low %v311, %v319
  %v526 = vunpack.c.l.s4 1983009808
  %v527 = vunpack.c.0.s8 %v526
  %v528 = vlaneseq
  %v529 = vshrl.u32 %v528, 7
  %v530 = vsub.s32 %v527, %v529
  %v531 = vrot.slane %v523, %v530
  %v533 = vunpack.c.l.s4 1983009808
  %v534 = vunpack.c.0.s8 %v533
  %v535 = vlaneseq
  %v536 = vshrl.u32 %v535, 7
  %v537 = vsub.s32 %v534, %v536
  %v538 = vrot.slane %v524, %v537
  %v539 = vcombine.low %v531, %v538
  %v540 = vcombine.low %v318, %v327
  %v541 = vcombine.low %v335, %v334
  %v543 = vunpack.c.l.s4 1983009808
  %v544 = vunpack.c.0.s8 %v543
  %v545 = vlaneseq
  %v546 = vshrl.u32 %v545, 7
  %v547 = vsub.s32 %v544, %v546
  %v548 = vrot.slane %v540, %v547
  %v550 = vunpack.c.l.s4 1983009808
  %v551 = vunpack.c.0.s8 %v550
  %v552 = vlaneseq
  %v553 = vshrl.u32 %v552, 7
  %v554 = vsub.s32 %v551, %v553
  %v555 = vrot.slane %v541, %v554
  %v556 = vcombine.low %v548, %v555
  %v557 = vcombine.low %v344, %v352
  %v558 = vcombine.low %v351, %v344
  %v560 = vunpack.c.l.s4 1983009808
  %v561 = vunpack.c.0.s8 %v560
  %v562 = vlaneseq
  %v563 = vshrl.u32 %v562, 7
  %v564 = vsub.s32 %v561, %v563
  %v565 = vrot.slane %v557, %v564
  %v567 = vunpack.c.l.s4 1983009808
  %v568 = vunpack.c.0.s8 %v567
  %v569 = vlaneseq
  %v570 = vshrl.u32 %v569, 7
  %v571 = vsub.s32 %v568, %v570
  %v572 = vrot.slane %v558, %v571
  %v573 = vcombine.low %v565, %v572
  %v574 = vcombine.low %v352, %v351
  %v576 = vunpack.c.l.s4 1983009808
  %v577 = vunpack.c.0.s8 %v576
  %v578 = vlaneseq
  %v579 = vshrl.u32 %v578, 7
  %v580 = vsub.s32 %v577, %v579
  %v581 = vrot.slane %v574, %v580
  %v582 = vcombine.low %v581, %v565
  %v583 = vcombine.low %v572, %v581
  %vm587 = vcmask 785408
  %v588 = vsel %vm587, %v369, 0
  %v590 = vsel %vm587, %v386, 0
  %v592 = vsel %vm587, %v403, 0
  %v594 = vsel %vm587, %v420, 0
  %v596 = vsel %vm587, %v437, 0
  %v598 = vsel %vm587, %v454, 0
  %v600 = vsel %vm587, %v471, 0
  %v602 = vsel %vm587, %v488, 0
  %v604 = vsel %vm587, %v505, 0
  %v606 = vsel %vm587, %v522, 0
  %v608 = vsel %vm587, %v539, 0
  %v610 = vsel %vm587, %v556, 0
  %612 = vmatprep.subr.mxu0 0.0
  %613 = vmatpush1.msra.mxu0 0.0
  %614 = vmatprep.subr.mxu0 0.0
  %615 = vmatpush1.msra.mxu0 0.0
  %616 = vmatprep.subr.mxu0 0.0
  %617 = vmatpush1.msra.mxu0 0.0
  %618 = vmatprep.subr.mxu0 0.0
  %619 = vmatpush1.msra.mxu0 0.0
  %620 = vmatprep.subr.mxu0 0.0
  %621 = vmatpush1.msra.mxu0 %v32
  %622 = vmatprep.subr.mxu0 0.0
  %623 = vmatpush1.msra.mxu0 %v31
  %624 = vmatprep.subr.mxu0 0.0
  %625 = vmatpush1.msra.mxu0 %v30
  %626 = vmatprep.subr.mxu0 0.0
  %627 = vmatpush1.msra.mxu0 %v29
  %628 = vmatprep.subr.mxu0 0.0
  %629 = vmatpush1.msra.mxu0 %v28
  %630 = vmatprep.subr.mxu0 0.0
  %631 = vmatpush1.msra.mxu0 %v27
  %632 = vmatprep.subr.mxu0 0.0
  %633 = vmatpush1.msra.mxu0 %v26
  %634 = vmatprep.subr.mxu0 0.0
  %635 = vmatpush1.msra.mxu0 %v25
  %636 = vmatprep.subr.mxu0 0.0
  %637 = vmatpush1.msra.mxu0 %v24
  %638 = vmatprep.subr.mxu0 0.0
  %639 = vmatpush1.msra.mxu0 %v23
  %640 = vmatprep.subr.mxu0 0.0
  %641 = vmatpush1.msra.mxu0 %v22
  %642 = vmatprep.subr.mxu0 0.0
  %643 = vmatpush1.msra.mxu0 %v21
  %644 = vmatprep.subr.mxu0 0.0
  %645 = vmatpush2.msra.mxu0 0.0
  %646 = vmatprep.subr.mxu0 0.0
  %647 = vmatpush2.msra.mxu0 0.0
  %648 = vmatprep.subr.mxu0 0.0
  %649 = vmatpush2.msra.mxu0 0.0
  %650 = vmatprep.subr.mxu0 0.0
  %651 = vmatpush2.msra.mxu0 0.0
  %652 = vmatprep.subr.mxu0 0.0
  %653 = vmatpush2.msra.mxu0 0.0
  %654 = vmatprep.subr.mxu0 0.0
  %655 = vmatpush2.msra.mxu0 0.0
  %656 = vmatprep.subr.mxu0 0.0
  %657 = vmatpush2.msra.mxu0 0.0
  %658 = vmatprep.subr.mxu0 0.0
  %659 = vmatpush2.msra.mxu0 0.0
  %660 = vmatprep.subr.mxu0 0.0
  %661 = vmatpush2.msra.mxu0 0.0
  %662 = vmatprep.subr.mxu0 0.0
  %663 = vmatpush2.msra.mxu0 0.0
  %664 = vmatprep.subr.mxu0 0.0
  %665 = vmatpush2.msra.mxu0 0.0
  %666 = vmatprep.subr.mxu0 0.0
  %667 = vmatpush2.msra.mxu0 0.0
  %668 = vmatprep.subr.mxu0 0.0
  %669 = vmatpush2.msra.mxu0 0.0
  %670 = vmatprep.subr.mxu0 0.0
  %671 = vmatpush2.msra.mxu0 0.0
  %672 = vmatprep.subr.mxu0 0.0
  %673 = vmatpush2.msra.mxu0 0.0
  %674 = vmatprep.subr.mxu0 0.0
  %675 = vmatpush2.msra.mxu0 0.0
  %676 = vmatprep.mubr.f32.mxu0 0.0
  %677 = vmatmul.mubr.f32.gmra.mxu0 %v588
  %v678 = vpop.f32.mrf.mxu0
  %v679 = vadd.f32 %v573, %v678
  %v680 = vpop.f32.mrf.mxu0
  %681 = vmatprep.mubr.f32.mxu0 0.0
  %682 = vmatmul.mubr.f32.gmra.mxu0 %v590
  %v683 = vpop.f32.mrf.mxu0
  %v684 = vadd.f32 %v582, %v683
  %v685 = vpop.f32.mrf.mxu0
  %686 = vmatprep.mubr.f32.mxu0 0.0
  %687 = vmatmul.mubr.f32.gmra.mxu0 %v592
  %v688 = vpop.f32.mrf.mxu0
  %v689 = vadd.f32 %v583, %v688
  %v690 = vpop.f32.mrf.mxu0
  %691 = vmatprep.mubr.f32.mxu0 0.0
  %692 = vmatmul.mubr.f32.gmra.mxu0 %v594
  %v693 = vpop.f32.mrf.mxu0
  %v694 = vadd.f32 %v573, %v693
  %v695 = vpop.f32.mrf.mxu0
  %696 = vmatprep.mubr.f32.mxu0 0.0
  %697 = vmatmul.mubr.f32.gmra.mxu0 %v596
  %v698 = vpop.f32.mrf.mxu0
  %v699 = vadd.f32 %v582, %v698
  %v700 = vpop.f32.mrf.mxu0
  %701 = vmatprep.mubr.f32.mxu0 0.0
  %702 = vmatmul.mubr.f32.gmra.mxu0 %v598
  %v703 = vpop.f32.mrf.mxu0
  %v704 = vadd.f32 %v583, %v703
  %v705 = vpop.f32.mrf.mxu0
  %706 = vmatprep.mubr.f32.mxu0 0.0
  %707 = vmatmul.mubr.f32.gmra.mxu0 %v600
  %v708 = vpop.f32.mrf.mxu0
  %v709 = vadd.f32 %v573, %v708
  %v710 = vpop.f32.mrf.mxu0
  %711 = vmatprep.mubr.f32.mxu0 0.0
  %712 = vmatmul.mubr.f32.gmra.mxu0 %v602
  %v713 = vpop.f32.mrf.mxu0
  %v714 = vadd.f32 %v582, %v713
  %v715 = vpop.f32.mrf.mxu0
  %716 = vmatprep.mubr.f32.mxu0 0.0
  %717 = vmatmul.mubr.f32.gmra.mxu0 %v604
  %v718 = vpop.f32.mrf.mxu0
  %v719 = vadd.f32 %v583, %v718
  %v720 = vpop.f32.mrf.mxu0
  %721 = vmatprep.mubr.f32.mxu0 0.0
  %722 = vmatmul.mubr.f32.gmra.mxu0 %v606
  %v723 = vpop.f32.mrf.mxu0
  %v724 = vadd.f32 %v573, %v723
  %v725 = vpop.f32.mrf.mxu0
  %726 = vmatprep.mubr.f32.mxu0 0.0
  %727 = vmatmul.mubr.f32.gmra.mxu0 %v608
  %v728 = vpop.f32.mrf.mxu0
  %v729 = vadd.f32 %v582, %v728
  %v730 = vpop.f32.mrf.mxu0
  %731 = vmatprep.mubr.f32.mxu0 0.0
  %732 = vmatmul.mubr.f32.gmra.mxu0 %v610
  %v733 = vpop.f32.mrf.mxu0
  %v734 = vadd.f32 %v583, %v733
  %v735 = vpop.f32.mrf.mxu0
  %736 = vdwg.mxu0
  %v749 = vcombine.high %v679, %v679
  %v751 = vunpack.c.l.s4 1983009808
  %v752 = vunpack.c.0.s8 %v751
  %v753 = vlaneseq
  %v754 = vshrl.u32 %v753, 7
  %v755 = vsub.s32 %v752, %v754
  %v756 = vrot.slane %v679, %v755
  %v758 = vunpack.c.l.s4 1983009808
  %v759 = vunpack.c.0.s8 %v758
  %v760 = vlaneseq
  %v761 = vshrl.u32 %v760, 7
  %v762 = vsub.s32 %v759, %v761
  %v763 = vrot.slane %v749, %v762
  %v764 = vcombine.high %v756, %v756
  %v765 = vcombine.high %v763, %v763
  %v766 = vcombine.high %v684, %v684
  %v768 = vunpack.c.l.s4 1983009808
  %v769 = vunpack.c.0.s8 %v768
  %v770 = vlaneseq
  %v771 = vshrl.u32 %v770, 7
  %v772 = vsub.s32 %v769, %v771
  %v773 = vrot.slane %v684, %v772
  %v775 = vunpack.c.l.s4 1983009808
  %v776 = vunpack.c.0.s8 %v775
  %v777 = vlaneseq
  %v778 = vshrl.u32 %v777, 7
  %v779 = vsub.s32 %v776, %v778
  %v780 = vrot.slane %v766, %v779
  %v781 = vcombine.high %v773, %v773
  %v782 = vcombine.high %v780, %v780
  %v783 = vcombine.high %v689, %v689
  %v785 = vunpack.c.l.s4 1983009808
  %v786 = vunpack.c.0.s8 %v785
  %v787 = vlaneseq
  %v788 = vshrl.u32 %v787, 7
  %v789 = vsub.s32 %v786, %v788
  %v790 = vrot.slane %v689, %v789
  %v792 = vunpack.c.l.s4 1983009808
  %v793 = vunpack.c.0.s8 %v792
  %v794 = vlaneseq
  %v795 = vshrl.u32 %v794, 7
  %v796 = vsub.s32 %v793, %v795
  %v797 = vrot.slane %v783, %v796
  %v798 = vcombine.high %v790, %v790
  %v799 = vcombine.high %v797, %v797
  %v800 = vcombine.high %v694, %v694
  %v802 = vunpack.c.l.s4 1983009808
  %v803 = vunpack.c.0.s8 %v802
  %v804 = vlaneseq
  %v805 = vshrl.u32 %v804, 7
  %v806 = vsub.s32 %v803, %v805
  %v807 = vrot.slane %v694, %v806
  %v809 = vunpack.c.l.s4 1983009808
  %v810 = vunpack.c.0.s8 %v809
  %v811 = vlaneseq
  %v812 = vshrl.u32 %v811, 7
  %v813 = vsub.s32 %v810, %v812
  %v814 = vrot.slane %v800, %v813
  %v815 = vcombine.high %v807, %v807
  %v816 = vcombine.high %v814, %v814
  %v817 = vcombine.high %v699, %v699
  %v819 = vunpack.c.l.s4 1983009808
  %v820 = vunpack.c.0.s8 %v819
  %v821 = vlaneseq
  %v822 = vshrl.u32 %v821, 7
  %v823 = vsub.s32 %v820, %v822
  %v824 = vrot.slane %v699, %v823
  %v826 = vunpack.c.l.s4 1983009808
  %v827 = vunpack.c.0.s8 %v826
  %v828 = vlaneseq
  %v829 = vshrl.u32 %v828, 7
  %v830 = vsub.s32 %v827, %v829
  %v831 = vrot.slane %v817, %v830
  %v832 = vcombine.high %v824, %v824
  %v833 = vcombine.high %v831, %v831
  %v834 = vcombine.high %v704, %v704
  %v836 = vunpack.c.l.s4 1983009808
  %v837 = vunpack.c.0.s8 %v836
  %v838 = vlaneseq
  %v839 = vshrl.u32 %v838, 7
  %v840 = vsub.s32 %v837, %v839
  %v841 = vrot.slane %v704, %v840
  %v843 = vunpack.c.l.s4 1983009808
  %v844 = vunpack.c.0.s8 %v843
  %v845 = vlaneseq
  %v846 = vshrl.u32 %v845, 7
  %v847 = vsub.s32 %v844, %v846
  %v848 = vrot.slane %v834, %v847
  %v849 = vcombine.high %v841, %v841
  %v850 = vcombine.high %v848, %v848
  %v851 = vcombine.high %v709, %v709
  %v853 = vunpack.c.l.s4 1983009808
  %v854 = vunpack.c.0.s8 %v853
  %v855 = vlaneseq
  %v856 = vshrl.u32 %v855, 7
  %v857 = vsub.s32 %v854, %v856
  %v858 = vrot.slane %v709, %v857
  %v860 = vunpack.c.l.s4 1983009808
  %v861 = vunpack.c.0.s8 %v860
  %v862 = vlaneseq
  %v863 = vshrl.u32 %v862, 7
  %v864 = vsub.s32 %v861, %v863
  %v865 = vrot.slane %v851, %v864
  %v866 = vcombine.high %v858, %v858
  %v867 = vcombine.high %v865, %v865
  %v868 = vcombine.high %v714, %v714
  %v870 = vunpack.c.l.s4 1983009808
  %v871 = vunpack.c.0.s8 %v870
  %v872 = vlaneseq
  %v873 = vshrl.u32 %v872, 7
  %v874 = vsub.s32 %v871, %v873
  %v875 = vrot.slane %v714, %v874
  %v877 = vunpack.c.l.s4 1983009808
  %v878 = vunpack.c.0.s8 %v877
  %v879 = vlaneseq
  %v880 = vshrl.u32 %v879, 7
  %v881 = vsub.s32 %v878, %v880
  %v882 = vrot.slane %v868, %v881
  %v883 = vcombine.high %v875, %v875
  %v884 = vcombine.high %v882, %v882
  %v885 = vcombine.high %v719, %v719
  %v887 = vunpack.c.l.s4 1983009808
  %v888 = vunpack.c.0.s8 %v887
  %v889 = vlaneseq
  %v890 = vshrl.u32 %v889, 7
  %v891 = vsub.s32 %v888, %v890
  %v892 = vrot.slane %v719, %v891
  %v894 = vunpack.c.l.s4 1983009808
  %v895 = vunpack.c.0.s8 %v894
  %v896 = vlaneseq
  %v897 = vshrl.u32 %v896, 7
  %v898 = vsub.s32 %v895, %v897
  %v899 = vrot.slane %v885, %v898
  %v900 = vcombine.high %v892, %v892
  %v901 = vcombine.high %v899, %v899
  %v902 = vcombine.high %v724, %v724
  %v904 = vunpack.c.l.s4 1983009808
  %v905 = vunpack.c.0.s8 %v904
  %v906 = vlaneseq
  %v907 = vshrl.u32 %v906, 7
  %v908 = vsub.s32 %v905, %v907
  %v909 = vrot.slane %v724, %v908
  %v911 = vunpack.c.l.s4 1983009808
  %v912 = vunpack.c.0.s8 %v911
  %v913 = vlaneseq
  %v914 = vshrl.u32 %v913, 7
  %v915 = vsub.s32 %v912, %v914
  %v916 = vrot.slane %v902, %v915
  %v917 = vcombine.high %v909, %v909
  %v918 = vcombine.high %v916, %v916
  %v919 = vcombine.high %v729, %v729
  %v921 = vunpack.c.l.s4 1983009808
  %v922 = vunpack.c.0.s8 %v921
  %v923 = vlaneseq
  %v924 = vshrl.u32 %v923, 7
  %v925 = vsub.s32 %v922, %v924
  %v926 = vrot.slane %v729, %v925
  %v928 = vunpack.c.l.s4 1983009808
  %v929 = vunpack.c.0.s8 %v928
  %v930 = vlaneseq
  %v931 = vshrl.u32 %v930, 7
  %v932 = vsub.s32 %v929, %v931
  %v933 = vrot.slane %v919, %v932
  %v934 = vcombine.high %v926, %v926
  %v935 = vcombine.high %v933, %v933
  %v936 = vcombine.high %v734, %v734
  %v938 = vunpack.c.l.s4 1983009808
  %v939 = vunpack.c.0.s8 %v938
  %v940 = vlaneseq
  %v941 = vshrl.u32 %v940, 7
  %v942 = vsub.s32 %v939, %v941
  %v943 = vrot.slane %v734, %v942
  %v945 = vunpack.c.l.s4 1983009808
  %v946 = vunpack.c.0.s8 %v945
  %v947 = vlaneseq
  %v948 = vshrl.u32 %v947, 7
  %v949 = vsub.s32 %v946, %v948
  %v950 = vrot.slane %v936, %v949
  %v951 = vcombine.high %v943, %v943
  %v952 = vcombine.high %v950, %v950
  %v1001 = vmax.f32 %v756, 0.0
  %v1002 = vmax.f32 %v764, 0.0
  %v1003 = vmax.f32 %v763, 0.0
  %v1004 = vmax.f32 %v765, 0.0
  %v1005 = vmax.f32 %v773, 0.0
  %v1006 = vmax.f32 %v781, 0.0
  %v1007 = vmax.f32 %v780, 0.0
  %v1008 = vmax.f32 %v782, 0.0
  %v1009 = vmax.f32 %v790, 0.0
  %v1010 = vmax.f32 %v798, 0.0
  %v1011 = vmax.f32 %v797, 0.0
  %v1012 = vmax.f32 %v799, 0.0
  %v1013 = vmax.f32 %v807, 0.0
  %v1014 = vmax.f32 %v815, 0.0
  %v1015 = vmax.f32 %v814, 0.0
  %v1016 = vmax.f32 %v816, 0.0
  %v1017 = vmax.f32 %v824, 0.0
  %v1018 = vmax.f32 %v832, 0.0
  %v1019 = vmax.f32 %v831, 0.0
  %v1020 = vmax.f32 %v833, 0.0
  %v1021 = vmax.f32 %v841, 0.0
  %v1022 = vmax.f32 %v849, 0.0
  %v1023 = vmax.f32 %v848, 0.0
  %v1024 = vmax.f32 %v850, 0.0
  %v1025 = vmax.f32 %v858, 0.0
  %v1026 = vmax.f32 %v866, 0.0
  %v1027 = vmax.f32 %v865, 0.0
  %v1028 = vmax.f32 %v867, 0.0
  %v1029 = vmax.f32 %v875, 0.0
  %v1030 = vmax.f32 %v883, 0.0
  %v1031 = vmax.f32 %v882, 0.0
  %v1032 = vmax.f32 %v884, 0.0
  %v1033 = vmax.f32 %v892, 0.0
  %v1034 = vmax.f32 %v900, 0.0
  %v1035 = vmax.f32 %v899, 0.0
  %v1036 = vmax.f32 %v901, 0.0
  %v1037 = vmax.f32 %v909, 0.0
  %v1038 = vmax.f32 %v917, 0.0
  %v1039 = vmax.f32 %v916, 0.0
  %v1040 = vmax.f32 %v918, 0.0
  %v1041 = vmax.f32 %v926, 0.0
  %v1042 = vmax.f32 %v934, 0.0
  %v1043 = vmax.f32 %v933, 0.0
  %v1044 = vmax.f32 %v935, 0.0
  %v1045 = vmax.f32 %v943, 0.0
  %v1046 = vmax.f32 %v951, 0.0
  %v1047 = vmax.f32 %v950, 0.0
  %v1048 = vmax.f32 %v952, 0.0
  %v1097 = vcombine.low %v1001, %v1002
  %v1099 = vunpack.c.l.s4 1983009808
  %v1100 = vunpack.c.0.s8 %v1099
  %v1101 = vlaneseq
  %v1102 = vshrl.u32 %v1101, 7
  %v1103 = vsub.s32 %v1100, %v1102
  %v1104 = vrot.slane %v1097, %v1103
  %v1106 = vunpack.c.l.s4 1983009808
  %v1107 = vunpack.c.0.s8 %v1106
  %v1108 = vlaneseq
  %v1109 = vshrl.u32 %v1108, 7
  %v1110 = vsub.s32 %v1107, %v1109
  %v1111 = vrot.slane %v1003, %v1110
  %v1112 = vcombine.low %v1104, %v1111
  %v1113 = vcombine.low %v1004, %v1005
  %v1115 = vunpack.c.l.s4 1983009808
  %v1116 = vunpack.c.0.s8 %v1115
  %v1117 = vlaneseq
  %v1118 = vshrl.u32 %v1117, 7
  %v1119 = vsub.s32 %v1116, %v1118
  %v1120 = vrot.slane %v1113, %v1119
  %v1122 = vunpack.c.l.s4 1983009808
  %v1123 = vunpack.c.0.s8 %v1122
  %v1124 = vlaneseq
  %v1125 = vshrl.u32 %v1124, 7
  %v1126 = vsub.s32 %v1123, %v1125
  %v1127 = vrot.slane %v1006, %v1126
  %v1128 = vcombine.low %v1120, %v1127
  %v1129 = vcombine.low %v1007, %v1008
  %v1131 = vunpack.c.l.s4 1983009808
  %v1132 = vunpack.c.0.s8 %v1131
  %v1133 = vlaneseq
  %v1134 = vshrl.u32 %v1133, 7
  %v1135 = vsub.s32 %v1132, %v1134
  %v1136 = vrot.slane %v1129, %v1135
  %v1138 = vunpack.c.l.s4 1983009808
  %v1139 = vunpack.c.0.s8 %v1138
  %v1140 = vlaneseq
  %v1141 = vshrl.u32 %v1140, 7
  %v1142 = vsub.s32 %v1139, %v1141
  %v1143 = vrot.slane %v1009, %v1142
  %v1144 = vcombine.low %v1136, %v1143
  %v1145 = vcombine.low %v1010, %v1011
  %v1147 = vunpack.c.l.s4 1983009808
  %v1148 = vunpack.c.0.s8 %v1147
  %v1149 = vlaneseq
  %v1150 = vshrl.u32 %v1149, 7
  %v1151 = vsub.s32 %v1148, %v1150
  %v1152 = vrot.slane %v1145, %v1151
  %v1154 = vunpack.c.l.s4 1983009808
  %v1155 = vunpack.c.0.s8 %v1154
  %v1156 = vlaneseq
  %v1157 = vshrl.u32 %v1156, 7
  %v1158 = vsub.s32 %v1155, %v1157
  %v1159 = vrot.slane %v1012, %v1158
  %v1160 = vcombine.low %v1152, %v1159
  %v1161 = vcombine.low %v1013, %v1014
  %v1163 = vunpack.c.l.s4 1983009808
  %v1164 = vunpack.c.0.s8 %v1163
  %v1165 = vlaneseq
  %v1166 = vshrl.u32 %v1165, 7
  %v1167 = vsub.s32 %v1164, %v1166
  %v1168 = vrot.slane %v1161, %v1167
  %v1170 = vunpack.c.l.s4 1983009808
  %v1171 = vunpack.c.0.s8 %v1170
  %v1172 = vlaneseq
  %v1173 = vshrl.u32 %v1172, 7
  %v1174 = vsub.s32 %v1171, %v1173
  %v1175 = vrot.slane %v1015, %v1174
  %v1176 = vcombine.low %v1168, %v1175
  %v1177 = vcombine.low %v1016, %v1017
  %v1179 = vunpack.c.l.s4 1983009808
  %v1180 = vunpack.c.0.s8 %v1179
  %v1181 = vlaneseq
  %v1182 = vshrl.u32 %v1181, 7
  %v1183 = vsub.s32 %v1180, %v1182
  %v1184 = vrot.slane %v1177, %v1183
  %v1186 = vunpack.c.l.s4 1983009808
  %v1187 = vunpack.c.0.s8 %v1186
  %v1188 = vlaneseq
  %v1189 = vshrl.u32 %v1188, 7
  %v1190 = vsub.s32 %v1187, %v1189
  %v1191 = vrot.slane %v1018, %v1190
  %v1192 = vcombine.low %v1184, %v1191
  %v1193 = vcombine.low %v1019, %v1020
  %v1195 = vunpack.c.l.s4 1983009808
  %v1196 = vunpack.c.0.s8 %v1195
  %v1197 = vlaneseq
  %v1198 = vshrl.u32 %v1197, 7
  %v1199 = vsub.s32 %v1196, %v1198
  %v1200 = vrot.slane %v1193, %v1199
  %v1202 = vunpack.c.l.s4 1983009808
  %v1203 = vunpack.c.0.s8 %v1202
  %v1204 = vlaneseq
  %v1205 = vshrl.u32 %v1204, 7
  %v1206 = vsub.s32 %v1203, %v1205
  %v1207 = vrot.slane %v1021, %v1206
  %v1208 = vcombine.low %v1200, %v1207
  %v1209 = vcombine.low %v1022, %v1023
  %v1211 = vunpack.c.l.s4 1983009808
  %v1212 = vunpack.c.0.s8 %v1211
  %v1213 = vlaneseq
  %v1214 = vshrl.u32 %v1213, 7
  %v1215 = vsub.s32 %v1212, %v1214
  %v1216 = vrot.slane %v1209, %v1215
  %v1218 = vunpack.c.l.s4 1983009808
  %v1219 = vunpack.c.0.s8 %v1218
  %v1220 = vlaneseq
  %v1221 = vshrl.u32 %v1220, 7
  %v1222 = vsub.s32 %v1219, %v1221
  %v1223 = vrot.slane %v1024, %v1222
  %v1224 = vcombine.low %v1216, %v1223
  %v1225 = vcombine.low %v1025, %v1026
  %v1227 = vunpack.c.l.s4 1983009808
  %v1228 = vunpack.c.0.s8 %v1227
  %v1229 = vlaneseq
  %v1230 = vshrl.u32 %v1229, 7
  %v1231 = vsub.s32 %v1228, %v1230
  %v1232 = vrot.slane %v1225, %v1231
  %v1234 = vunpack.c.l.s4 1983009808
  %v1235 = vunpack.c.0.s8 %v1234
  %v1236 = vlaneseq
  %v1237 = vshrl.u32 %v1236, 7
  %v1238 = vsub.s32 %v1235, %v1237
  %v1239 = vrot.slane %v1027, %v1238
  %v1240 = vcombine.low %v1232, %v1239
  %v1241 = vcombine.low %v1028, %v1029
  %v1243 = vunpack.c.l.s4 1983009808
  %v1244 = vunpack.c.0.s8 %v1243
  %v1245 = vlaneseq
  %v1246 = vshrl.u32 %v1245, 7
  %v1247 = vsub.s32 %v1244, %v1246
  %v1248 = vrot.slane %v1241, %v1247
  %v1250 = vunpack.c.l.s4 1983009808
  %v1251 = vunpack.c.0.s8 %v1250
  %v1252 = vlaneseq
  %v1253 = vshrl.u32 %v1252, 7
  %v1254 = vsub.s32 %v1251, %v1253
  %v1255 = vrot.slane %v1030, %v1254
  %v1256 = vcombine.low %v1248, %v1255
  %v1257 = vcombine.low %v1031, %v1032
  %v1259 = vunpack.c.l.s4 1983009808
  %v1260 = vunpack.c.0.s8 %v1259
  %v1261 = vlaneseq
  %v1262 = vshrl.u32 %v1261, 7
  %v1263 = vsub.s32 %v1260, %v1262
  %v1264 = vrot.slane %v1257, %v1263
  %v1266 = vunpack.c.l.s4 1983009808
  %v1267 = vunpack.c.0.s8 %v1266
  %v1268 = vlaneseq
  %v1269 = vshrl.u32 %v1268, 7
  %v1270 = vsub.s32 %v1267, %v1269
  %v1271 = vrot.slane %v1033, %v1270
  %v1272 = vcombine.low %v1264, %v1271
  %v1273 = vcombine.low %v1034, %v1035
  %v1275 = vunpack.c.l.s4 1983009808
  %v1276 = vunpack.c.0.s8 %v1275
  %v1277 = vlaneseq
  %v1278 = vshrl.u32 %v1277, 7
  %v1279 = vsub.s32 %v1276, %v1278
  %v1280 = vrot.slane %v1273, %v1279
  %v1282 = vunpack.c.l.s4 1983009808
  %v1283 = vunpack.c.0.s8 %v1282
  %v1284 = vlaneseq
  %v1285 = vshrl.u32 %v1284, 7
  %v1286 = vsub.s32 %v1283, %v1285
  %v1287 = vrot.slane %v1036, %v1286
  %v1288 = vcombine.low %v1280, %v1287
  %v1289 = vcombine.low %v1037, %v1038
  %v1291 = vunpack.c.l.s4 1983009808
  %v1292 = vunpack.c.0.s8 %v1291
  %v1293 = vlaneseq
  %v1294 = vshrl.u32 %v1293, 7
  %v1295 = vsub.s32 %v1292, %v1294
  %v1296 = vrot.slane %v1289, %v1295
  %v1298 = vunpack.c.l.s4 1983009808
  %v1299 = vunpack.c.0.s8 %v1298
  %v1300 = vlaneseq
  %v1301 = vshrl.u32 %v1300, 7
  %v1302 = vsub.s32 %v1299, %v1301
  %v1303 = vrot.slane %v1039, %v1302
  %v1304 = vcombine.low %v1296, %v1303
  %v1305 = vcombine.low %v1040, %v1041
  %v1307 = vunpack.c.l.s4 1983009808
  %v1308 = vunpack.c.0.s8 %v1307
  %v1309 = vlaneseq
  %v1310 = vshrl.u32 %v1309, 7
  %v1311 = vsub.s32 %v1308, %v1310
  %v1312 = vrot.slane %v1305, %v1311
  %v1314 = vunpack.c.l.s4 1983009808
  %v1315 = vunpack.c.0.s8 %v1314
  %v1316 = vlaneseq
  %v1317 = vshrl.u32 %v1316, 7
  %v1318 = vsub.s32 %v1315, %v1317
  %v1319 = vrot.slane %v1042, %v1318
  %v1320 = vcombine.low %v1312, %v1319
  %v1321 = vcombine.low %v1043, %v1044
  %v1323 = vunpack.c.l.s4 1983009808
  %v1324 = vunpack.c.0.s8 %v1323
  %v1325 = vlaneseq
  %v1326 = vshrl.u32 %v1325, 7
  %v1327 = vsub.s32 %v1324, %v1326
  %v1328 = vrot.slane %v1321, %v1327
  %v1330 = vunpack.c.l.s4 1983009808
  %v1331 = vunpack.c.0.s8 %v1330
  %v1332 = vlaneseq
  %v1333 = vshrl.u32 %v1332, 7
  %v1334 = vsub.s32 %v1331, %v1333
  %v1335 = vrot.slane %v1045, %v1334
  %v1336 = vcombine.low %v1328, %v1335
  %v1337 = vcombine.low %v1046, %v1047
  %v1339 = vunpack.c.l.s4 1983009808
  %v1340 = vunpack.c.0.s8 %v1339
  %v1341 = vlaneseq
  %v1342 = vshrl.u32 %v1341, 7
  %v1343 = vsub.s32 %v1340, %v1342
  %v1344 = vrot.slane %v1337, %v1343
  %v1346 = vunpack.c.l.s4 1983009808
  %v1347 = vunpack.c.0.s8 %v1346
  %v1348 = vlaneseq
  %v1349 = vshrl.u32 %v1348, 7
  %v1350 = vsub.s32 %v1347, %v1349
  %v1351 = vrot.slane %v1048, %v1350
  %v1352 = vcombine.low %v1344, %v1351
  %vm1369 = vcmask 259072
  %v1370 = vsel %vm1369, %v1112, -inf
  %v1371 = vrot.slane %v1370, 4
  %v1372 = vmax.f32 %v1370, %v1371
  %v1373 = vrot.slane %v1372, 2
  %v1374 = vmax.f32 %v1372, %v1373
  %v1375 = vrot.slane %v1374, 1
  %v1376 = vmax.f32 %v1374, %v1375
  %v1377 = vsel %vm1369, %v1128, -inf
  %v1378 = vrot.slane %v1377, 4
  %v1379 = vmax.f32 %v1377, %v1378
  %v1380 = vrot.slane %v1379, 2
  %v1381 = vmax.f32 %v1379, %v1380
  %v1382 = vrot.slane %v1381, 1
  %v1383 = vmax.f32 %v1381, %v1382
  %v1384 = vsel %vm1369, %v1144, -inf
  %v1385 = vrot.slane %v1384, 4
  %v1386 = vmax.f32 %v1384, %v1385
  %v1387 = vrot.slane %v1386, 2
  %v1388 = vmax.f32 %v1386, %v1387
  %v1389 = vrot.slane %v1388, 1
  %v1390 = vmax.f32 %v1388, %v1389
  %v1391 = vsel %vm1369, %v1160, -inf
  %v1392 = vrot.slane %v1391, 4
  %v1393 = vmax.f32 %v1391, %v1392
  %v1394 = vrot.slane %v1393, 2
  %v1395 = vmax.f32 %v1393, %v1394
  %v1396 = vrot.slane %v1395, 1
  %v1397 = vmax.f32 %v1395, %v1396
  %v1398 = vsel %vm1369, %v1176, -inf
  %v1399 = vrot.slane %v1398, 4
  %v1400 = vmax.f32 %v1398, %v1399
  %v1401 = vrot.slane %v1400, 2
  %v1402 = vmax.f32 %v1400, %v1401
  %v1403 = vrot.slane %v1402, 1
  %v1404 = vmax.f32 %v1402, %v1403
  %v1405 = vsel %vm1369, %v1192, -inf
  %v1406 = vrot.slane %v1405, 4
  %v1407 = vmax.f32 %v1405, %v1406
  %v1408 = vrot.slane %v1407, 2
  %v1409 = vmax.f32 %v1407, %v1408
  %v1410 = vrot.slane %v1409, 1
  %v1411 = vmax.f32 %v1409, %v1410
  %v1412 = vsel %vm1369, %v1208, -inf
  %v1413 = vrot.slane %v1412, 4
  %v1414 = vmax.f32 %v1412, %v1413
  %v1415 = vrot.slane %v1414, 2
  %v1416 = vmax.f32 %v1414, %v1415
  %v1417 = vrot.slane %v1416, 1
  %v1418 = vmax.f32 %v1416, %v1417
  %v1419 = vsel %vm1369, %v1224, -inf
  %v1420 = vrot.slane %v1419, 4
  %v1421 = vmax.f32 %v1419, %v1420
  %v1422 = vrot.slane %v1421, 2
  %v1423 = vmax.f32 %v1421, %v1422
  %v1424 = vrot.slane %v1423, 1
  %v1425 = vmax.f32 %v1423, %v1424
  %v1426 = vsel %vm1369, %v1240, -inf
  %v1427 = vrot.slane %v1426, 4
  %v1428 = vmax.f32 %v1426, %v1427
  %v1429 = vrot.slane %v1428, 2
  %v1430 = vmax.f32 %v1428, %v1429
  %v1431 = vrot.slane %v1430, 1
  %v1432 = vmax.f32 %v1430, %v1431
  %v1433 = vsel %vm1369, %v1256, -inf
  %v1434 = vrot.slane %v1433, 4
  %v1435 = vmax.f32 %v1433, %v1434
  %v1436 = vrot.slane %v1435, 2
  %v1437 = vmax.f32 %v1435, %v1436
  %v1438 = vrot.slane %v1437, 1
  %v1439 = vmax.f32 %v1437, %v1438
  %v1440 = vsel %vm1369, %v1272, -inf
  %v1441 = vrot.slane %v1440, 4
  %v1442 = vmax.f32 %v1440, %v1441
  %v1443 = vrot.slane %v1442, 2
  %v1444 = vmax.f32 %v1442, %v1443
  %v1445 = vrot.slane %v1444, 1
  %v1446 = vmax.f32 %v1444, %v1445
  %v1447 = vsel %vm1369, %v1288, -inf
  %v1448 = vrot.slane %v1447, 4
  %v1449 = vmax.f32 %v1447, %v1448
  %v1450 = vrot.slane %v1449, 2
  %v1451 = vmax.f32 %v1449, %v1450
  %v1452 = vrot.slane %v1451, 1
  %v1453 = vmax.f32 %v1451, %v1452
  %v1454 = vsel %vm1369, %v1304, -inf
  %v1455 = vrot.slane %v1454, 4
  %v1456 = vmax.f32 %v1454, %v1455
  %v1457 = vrot.slane %v1456, 2
  %v1458 = vmax.f32 %v1456, %v1457
  %v1459 = vrot.slane %v1458, 1
  %v1460 = vmax.f32 %v1458, %v1459
  %v1461 = vsel %vm1369, %v1320, -inf
  %v1462 = vrot.slane %v1461, 4
  %v1463 = vmax.f32 %v1461, %v1462
  %v1464 = vrot.slane %v1463, 2
  %v1465 = vmax.f32 %v1463, %v1464
  %v1466 = vrot.slane %v1465, 1
  %v1467 = vmax.f32 %v1465, %v1466
  %v1468 = vsel %vm1369, %v1336, -inf
  %v1469 = vrot.slane %v1468, 4
  %v1470 = vmax.f32 %v1468, %v1469
  %v1471 = vrot.slane %v1470, 2
  %v1472 = vmax.f32 %v1470, %v1471
  %v1473 = vrot.slane %v1472, 1
  %v1474 = vmax.f32 %v1472, %v1473
  %v1475 = vsel %vm1369, %v1352, -inf
  %v1476 = vrot.slane %v1475, 4
  %v1477 = vmax.f32 %v1475, %v1476
  %v1478 = vrot.slane %v1477, 2
  %v1479 = vmax.f32 %v1477, %v1478
  %v1480 = vrot.slane %v1479, 1
  %v1481 = vmax.f32 %v1479, %v1480
  %v1482 = vld [vmem:[%s4] sm:$0xff]
  %v1483 = vld [vmem:[%s4 + $0x8] sm:$0xff]
  %vm1500 = vcmask 1041409
  %v1501 = vsel %vm1500, %v1383, %v1376
  %vm1502 = vcmask 1042434
  %v1503 = vsel %vm1502, %v1390, %v1501
  %vm1504 = vcmask 1043459
  %v1505 = vsel %vm1504, %v1397, %v1503
  %vm1506 = vcmask 1044484
  %v1507 = vsel %vm1506, %v1404, %v1505
  %vm1508 = vcmask 1045509
  %v1509 = vsel %vm1508, %v1411, %v1507
  %vm1510 = vcmask 1046534
  %v1511 = vsel %vm1510, %v1418, %v1509
  %vm1512 = vcmask 1047559
  %v1513 = vsel %vm1512, %v1425, %v1511
  %v1514 = vsel %vm1500, %v1439, %v1432
  %v1515 = vsel %vm1502, %v1446, %v1514
  %v1516 = vsel %vm1504, %v1453, %v1515
  %v1517 = vsel %vm1506, %v1460, %v1516
  %v1518 = vsel %vm1508, %v1467, %v1517
  %v1519 = vsel %vm1510, %v1474, %v1518
  %v1520 = vsel %vm1512, %v1481, %v1519
  %1521 = vrot.lane.b32.xlu0 %v1513, 32
  %v1522 = vpop.permute.xlu0 %1521
  %1523 = vrot.lane.b32.xlu0 %v1520, 32
  %v1524 = vpop.permute.xlu0 %1523
  %vm1527 = vcmask 261120
  %v1528 = vsel %vm1527, %v1482, %v1522
  %v1529 = vsel %vm1527, %v1483, %v1524
  %vm1530 = vcmask 523264
  %v1532 = vsel %vm1530, %v1528, 0
  %v1535 = vsel %vm1530, %v1529, 0
  %1537 = vmatprep.subr.mxu0 0.0
  %1538 = vmatpush1.msra.mxu0 0.0
  %1539 = vmatprep.subr.mxu0 0.0
  %1540 = vmatpush1.msra.mxu0 0.0
  %1541 = vmatprep.subr.mxu0 0.0
  %1542 = vmatpush1.msra.mxu0 0.0
  %1543 = vmatprep.subr.mxu0 0.0
  %1544 = vmatpush1.msra.mxu0 0.0
  %1545 = vmatprep.subr.mxu0 0.0
  %1546 = vmatpush1.msra.mxu0 0.0
  %1547 = vmatprep.subr.mxu0 0.0
  %1548 = vmatpush1.msra.mxu0 0.0
  %1549 = vmatprep.subr.mxu0 0.0
  %1550 = vmatpush1.msra.mxu0 0.0
  %1551 = vmatprep.subr.mxu0 0.0
  %1552 = vmatpush1.msra.mxu0 0.0
  %1553 = vmatprep.subr.mxu0 0.0
  %1554 = vmatpush1.msra.mxu0 %v41
  %1555 = vmatprep.subr.mxu0 0.0
  %1556 = vmatpush1.msra.mxu0 %v40
  %1557 = vmatprep.subr.mxu0 0.0
  %1558 = vmatpush1.msra.mxu0 %v39
  %1559 = vmatprep.subr.mxu0 0.0
  %1560 = vmatpush1.msra.mxu0 %v38
  %1561 = vmatprep.subr.mxu0 0.0
  %1562 = vmatpush1.msra.mxu0 %v37
  %1563 = vmatprep.subr.mxu0 0.0
  %1564 = vmatpush1.msra.mxu0 %v36
  %1565 = vmatprep.subr.mxu0 0.0
  %1566 = vmatpush1.msra.mxu0 %v35
  %1567 = vmatprep.subr.mxu0 0.0
  %1568 = vmatpush1.msra.mxu0 %v34
  %1569 = vmatprep.subr.mxu0 0.0
  %1570 = vmatpush2.msra.mxu0 0.0
  %1571 = vmatprep.subr.mxu0 0.0
  %1572 = vmatpush2.msra.mxu0 0.0
  %1573 = vmatprep.subr.mxu0 0.0
  %1574 = vmatpush2.msra.mxu0 0.0
  %1575 = vmatprep.subr.mxu0 0.0
  %1576 = vmatpush2.msra.mxu0 0.0
  %1577 = vmatprep.subr.mxu0 0.0
  %1578 = vmatpush2.msra.mxu0 0.0
  %1579 = vmatprep.subr.mxu0 0.0
  %1580 = vmatpush2.msra.mxu0 0.0
  %1581 = vmatprep.subr.mxu0 0.0
  %1582 = vmatpush2.msra.mxu0 0.0
  %1583 = vmatprep.subr.mxu0 0.0
  %1584 = vmatpush2.msra.mxu0 0.0
  %1585 = vmatprep.subr.mxu0 0.0
  %1586 = vmatpush2.msra.mxu0 0.0
  %1587 = vmatprep.subr.mxu0 0.0
  %1588 = vmatpush2.msra.mxu0 0.0
  %1589 = vmatprep.subr.mxu0 0.0
  %1590 = vmatpush2.msra.mxu0 0.0
  %1591 = vmatprep.subr.mxu0 0.0
  %1592 = vmatpush2.msra.mxu0 0.0
  %1593 = vmatprep.subr.mxu0 0.0
  %1594 = vmatpush2.msra.mxu0 0.0
  %1595 = vmatprep.subr.mxu0 0.0
  %1596 = vmatpush2.msra.mxu0 0.0
  %1597 = vmatprep.subr.mxu0 0.0
  %1598 = vmatpush2.msra.mxu0 0.0
  %1599 = vmatprep.subr.mxu0 0.0
  %1600 = vmatpush2.msra.mxu0 0.0
  %1601 = vmatprep.mubr.f32.mxu0 0.0
  %1602 = vmatmul.mubr.f32.gmra.mxu0 %v1532
  %v1603 = vpop.f32.mrf.mxu0
  %v1604 = vadd.f32 0.0, %v1603
  %v1605 = vpop.f32.mrf.mxu0
  %1606 = vmatprep.mubr.f32.mxu0 0.0
  %1607 = vmatmul.mubr.f32.gmra.mxu0 %v1535
  %v1608 = vpop.f32.mrf.mxu0
  %v1609 = vadd.f32 0.0, %v1608
  %v1610 = vpop.f32.mrf.mxu0
  %1611 = vdwg.mxu0
  %v1612 = vmul.f32 %v1604, %v1604
  %v1613 = vmul.f32 %v1609, %v1609
  %v1614 = vsel %vm1527, %v1612, 0.0
  %1615 = vadd.xlane.f32.xlu0 %v1614
  %v1616 = vpop.xlane.xlu0 %1615
  %v1617 = vsel %vm1527, %v1613, 0.0
  %1618 = vadd.xlane.f32.xlu0 %v1617
  %v1619 = vpop.xlane.xlu0 %1618
  %v1620 = vmax.f32 %v1616, 1e-12
  %v1621 = vmax.f32 %v1619, 1e-12
  %v1622 = vrsqrt.pop %v1620
  %v1623 = vrsqrt.pop %v1621
  %v1624 = vmul.f32 %v1604, %v1622
  %v1625 = vmul.f32 %v1609, %v1623
  %v1627 = vsel %vm1527, %v1624, 0
  %v1630 = vsel %vm1527, %v1625, 0
  %v1633 = vsel %vm1527, %v42, 0
  %v1636 = vsel %vm1527, %v43, 0
  %1638 = vmatprep.subr.mxu0 0.0
  %1639 = vmatpush1.xpose.msra.mxu0 0.0
  %1640 = vmatprep.subr.mxu0 0.0
  %1641 = vmatpush1.xpose.msra.mxu0 0.0
  %1642 = vmatprep.subr.mxu0 0.0
  %1643 = vmatpush1.xpose.msra.mxu0 0.0
  %1644 = vmatprep.subr.mxu0 0.0
  %1645 = vmatpush1.xpose.msra.mxu0 0.0
  %1646 = vmatprep.subr.mxu0 0.0
  %1647 = vmatpush1.xpose.msra.mxu0 0.0
  %1648 = vmatprep.subr.mxu0 0.0
  %1649 = vmatpush1.xpose.msra.mxu0 0.0
  %1650 = vmatprep.subr.mxu0 0.0
  %1651 = vmatpush1.xpose.msra.mxu0 0.0
  %1652 = vmatprep.subr.mxu0 0.0
  %1653 = vmatpush1.xpose.msra.mxu0 0.0
  %1654 = vmatprep.subr.mxu0 0.0
  %1655 = vmatpush1.xpose.msra.mxu0 0.0
  %1656 = vmatprep.subr.mxu0 0.0
  %1657 = vmatpush1.xpose.msra.mxu0 0.0
  %1658 = vmatprep.subr.mxu0 0.0
  %1659 = vmatpush1.xpose.msra.mxu0 0.0
  %1660 = vmatprep.subr.mxu0 0.0
  %1661 = vmatpush1.xpose.msra.mxu0 0.0
  %1662 = vmatprep.subr.mxu0 0.0
  %1663 = vmatpush1.xpose.msra.mxu0 %v1636
  %1664 = vmatprep.subr.mxu0 0.0
  %1665 = vmatpush1.xpose.msra.mxu0 %v1633
  %1666 = vmatprep.subr.mxu0 0.0
  %1667 = vmatpush1.xpose.msra.mxu0 %v1630
  %1668 = vmatprep.subr.mxu0 0.0
  %1669 = vmatpush1.xpose.msra.mxu0 %v1627
  %1670 = vmatprep.subr.mxu0 0.0
  %1671 = vmatpush2.xpose.msra.mxu0 0.0
  %1672 = vmatprep.subr.mxu0 0.0
  %1673 = vmatpush2.xpose.msra.mxu0 0.0
  %1674 = vmatprep.subr.mxu0 0.0
  %1675 = vmatpush2.xpose.msra.mxu0 0.0
  %1676 = vmatprep.subr.mxu0 0.0
  %1677 = vmatpush2.xpose.msra.mxu0 0.0
  %1678 = vmatprep.subr.mxu0 0.0
  %1679 = vmatpush2.xpose.msra.mxu0 0.0
  %1680 = vmatprep.subr.mxu0 0.0
  %1681 = vmatpush2.xpose.msra.mxu0 0.0
  %1682 = vmatprep.subr.mxu0 0.0
  %1683 = vmatpush2.xpose.msra.mxu0 0.0
  %1684 = vmatprep.subr.mxu0 0.0
  %1685 = vmatpush2.xpose.msra.mxu0 0.0
  %1686 = vmatprep.subr.mxu0 0.0
  %1687 = vmatpush2.xpose.msra.mxu0 0.0
  %1688 = vmatprep.subr.mxu0 0.0
  %1689 = vmatpush2.xpose.msra.mxu0 0.0
  %1690 = vmatprep.subr.mxu0 0.0
  %1691 = vmatpush2.xpose.msra.mxu0 0.0
  %1692 = vmatprep.subr.mxu0 0.0
  %1693 = vmatpush2.xpose.msra.mxu0 0.0
  %1694 = vmatprep.subr.mxu0 0.0
  %1695 = vmatpush2.xpose.msra.mxu0 0.0
  %1696 = vmatprep.subr.mxu0 0.0
  %1697 = vmatpush2.xpose.msra.mxu0 0.0
  %1698 = vmatprep.subr.mxu0 0.0
  %1699 = vmatpush2.xpose.msra.mxu0 0.0
  %1700 = vmatprep.subr.mxu0 0.0
  %1701 = vmatpush2.xpose.msra.mxu0 0.0
  %1702 = vmatprep.mubr.f32.mxu0 0.0
  %1703 = vmatmul.mubr.f32.gmra.mxu0 %v1627
  %v1704 = vpop.f32.mrf.mxu0
  %v1705 = vadd.f32 0.0, %v1704
  %v1706 = vpop.f32.mrf.mxu0
  %1707 = vmatprep.mubr.f32.mxu0 0.0
  %1708 = vmatmul.mubr.f32.gmra.mxu0 %v1630
  %v1709 = vpop.f32.mrf.mxu0
  %v1710 = vadd.f32 0.0, %v1709
  %v1711 = vpop.f32.mrf.mxu0
  %1712 = vdwg.mxu0
  %v1713 = vld [vmem:[%s2] sm:$0xff]
  %v1714 = vld [vmem:[%s2 + $0x8] sm:$0x7]
  %v1715 = vsub.f32 %v1705, 1.0
  %v1716 = vsub.f32 %v1710, 1.0
  %v1717 = vmul.f32 %v1715, %v1715
  %v1718 = vmul.f32 %v1716, %v1716
  %v1719 = vmul.f32 %v1717, -500000.0
  %v1720 = vmul.f32 %v1718, -500000.0
  %v1721 = vmul.f32 %v1719, 1.442695
  %v1722 = vpow.pop %v1721
  %v1723 = vmul.f32 %v1720, 1.442695
  %v1724 = vpow.pop %v1723
  %v1725 = vlaneseq
  %v1726 = vshrl.u32 %v1725, 7
  %v1727 = vsub.s32 0, %v1726
  %v1728 = vrot.slane %v1713, %v1727
  %v1729 = vmul.f32 %v1722, %v1728
  %v1730 = vmul.f32 %v1724, %v1728
  %v1731 = vadd.f32 %v1729, 0.0
  %v1732 = vadd.f32 %v1730, 0.0
  %v1733 = vsub.f32 %v1705, -0.9
  %v1734 = vsub.f32 %v1710, -0.9
  %v1735 = vmul.f32 %v1733, %v1733
  %v1736 = vmul.f32 %v1734, %v1734
  %v1737 = vmul.f32 %v1735, -50.0
  %v1738 = vmul.f32 %v1736, -50.0
  %v1739 = vmul.f32 %v1737, 1.442695
  %v1740 = vpow.pop %v1739
  %v1741 = vmul.f32 %v1738, 1.442695
  %v1742 = vpow.pop %v1741
  %v1743 = vlaneseq
  %v1744 = vshrl.u32 %v1743, 7
  %v1745 = vsub.s32 1, %v1744
  %v1746 = vrot.slane %v1713, %v1745
  %v1747 = vmul.f32 %v1740, %v1746
  %v1748 = vmul.f32 %v1742, %v1746
  %v1749 = vadd.f32 %v1731, %v1747
  %v1750 = vadd.f32 %v1732, %v1748
  %v1751 = vsub.f32 %v1705, -0.7
  %v1752 = vsub.f32 %v1710, -0.7
  %v1753 = vmul.f32 %v1751, %v1751
  %v1754 = vmul.f32 %v1752, %v1752
  %v1755 = vmul.f32 %v1753, -50.0
  %v1756 = vmul.f32 %v1754, -50.0
  %v1757 = vmul.f32 %v1755, 1.442695
  %v1758 = vpow.pop %v1757
  %v1759 = vmul.f32 %v1756, 1.442695
  %v1760 = vpow.pop %v1759
  %v1761 = vlaneseq
  %v1762 = vshrl.u32 %v1761, 7
  %v1763 = vsub.s32 2, %v1762
  %v1764 = vrot.slane %v1713, %v1763
  %v1765 = vmul.f32 %v1758, %v1764
  %v1766 = vmul.f32 %v1760, %v1764
  %v1767 = vadd.f32 %v1749, %v1765
  %v1768 = vadd.f32 %v1750, %v1766
  %v1769 = vsub.f32 %v1705, -0.5
  %v1770 = vsub.f32 %v1710, -0.5
  %v1771 = vmul.f32 %v1769, %v1769
  %v1772 = vmul.f32 %v1770, %v1770
  %v1773 = vmul.f32 %v1771, -50.0
  %v1774 = vmul.f32 %v1772, -50.0
  %v1775 = vmul.f32 %v1773, 1.442695
  %v1776 = vpow.pop %v1775
  %v1777 = vmul.f32 %v1774, 1.442695
  %v1778 = vpow.pop %v1777
  %v1779 = vlaneseq
  %v1780 = vshrl.u32 %v1779, 7
  %v1781 = vsub.s32 3, %v1780
  %v1782 = vrot.slane %v1713, %v1781
  %v1783 = vmul.f32 %v1776, %v1782
  %v1784 = vmul.f32 %v1778, %v1782
  %v1785 = vadd.f32 %v1767, %v1783
  %v1786 = vadd.f32 %v1768, %v1784
  %v1787 = vsub.f32 %v1705, -0.3
  %v1788 = vsub.f32 %v1710, -0.3
  %v1789 = vmul.f32 %v1787, %v1787
  %v1790 = vmul.f32 %v1788, %v1788
  %v1791 = vmul.f32 %v1789, -50.0
  %v1792 = vmul.f32 %v1790, -50.0
  %v1793 = vmul.f32 %v1791, 1.442695
  %v1794 = vpow.pop %v1793
  %v1795 = vmul.f32 %v1792, 1.442695
  %v1796 = vpow.pop %v1795
  %v1797 = vlaneseq
  %v1798 = vshrl.u32 %v1797, 7
  %v1799 = vsub.s32 4, %v1798
  %v1800 = vrot.slane %v1713, %v1799
  %v1801 = vmul.f32 %v1794, %v1800
  %v1802 = vmul.f32 %v1796, %v1800
  %v1803 = vadd.f32 %v1785, %v1801
  %v1804 = vadd.f32 %v1786, %v1802
  %v1805 = vsub.f32 %v1705, -0.1
  %v1806 = vsub.f32 %v1710, -0.1
  %v1807 = vmul.f32 %v1805, %v1805
  %v1808 = vmul.f32 %v1806, %v1806
  %v1809 = vmul.f32 %v1807, -50.0
  %v1810 = vmul.f32 %v1808, -50.0
  %v1811 = vmul.f32 %v1809, 1.442695
  %v1812 = vpow.pop %v1811
  %v1813 = vmul.f32 %v1810, 1.442695
  %v1814 = vpow.pop %v1813
  %v1815 = vlaneseq
  %v1816 = vshrl.u32 %v1815, 7
  %v1817 = vsub.s32 5, %v1816
  %v1818 = vrot.slane %v1713, %v1817
  %v1819 = vmul.f32 %v1812, %v1818
  %v1820 = vmul.f32 %v1814, %v1818
  %v1821 = vadd.f32 %v1803, %v1819
  %v1822 = vadd.f32 %v1804, %v1820
  %v1823 = vsub.f32 %v1705, 0.1
  %v1824 = vsub.f32 %v1710, 0.1
  %v1825 = vmul.f32 %v1823, %v1823
  %v1826 = vmul.f32 %v1824, %v1824
  %v1827 = vmul.f32 %v1825, -50.0
  %v1828 = vmul.f32 %v1826, -50.0
  %v1829 = vmul.f32 %v1827, 1.442695
  %v1830 = vpow.pop %v1829
  %v1831 = vmul.f32 %v1828, 1.442695
  %v1832 = vpow.pop %v1831
  %v1833 = vlaneseq
  %v1834 = vshrl.u32 %v1833, 7
  %v1835 = vsub.s32 6, %v1834
  %v1836 = vrot.slane %v1713, %v1835
  %v1837 = vmul.f32 %v1830, %v1836
  %v1838 = vmul.f32 %v1832, %v1836
  %v1839 = vadd.f32 %v1821, %v1837
  %v1840 = vadd.f32 %v1822, %v1838
  %v1841 = vsub.f32 %v1705, 0.3
  %v1842 = vsub.f32 %v1710, 0.3
  %v1843 = vmul.f32 %v1841, %v1841
  %v1844 = vmul.f32 %v1842, %v1842
  %v1845 = vmul.f32 %v1843, -50.0
  %v1846 = vmul.f32 %v1844, -50.0
  %v1847 = vmul.f32 %v1845, 1.442695
  %v1848 = vpow.pop %v1847
  %v1849 = vmul.f32 %v1846, 1.442695
  %v1850 = vpow.pop %v1849
  %v1851 = vlaneseq
  %v1852 = vshrl.u32 %v1851, 7
  %v1853 = vsub.s32 7, %v1852
  %v1854 = vrot.slane %v1713, %v1853
  %v1855 = vmul.f32 %v1848, %v1854
  %v1856 = vmul.f32 %v1850, %v1854
  %v1857 = vadd.f32 %v1839, %v1855
  %v1858 = vadd.f32 %v1840, %v1856
  %v1859 = vsub.f32 %v1705, 0.5
  %v1860 = vsub.f32 %v1710, 0.5
  %v1861 = vmul.f32 %v1859, %v1859
  %v1862 = vmul.f32 %v1860, %v1860
  %v1863 = vmul.f32 %v1861, -50.0
  %v1864 = vmul.f32 %v1862, -50.0
  %v1865 = vmul.f32 %v1863, 1.442695
  %v1866 = vpow.pop %v1865
  %v1867 = vmul.f32 %v1864, 1.442695
  %v1868 = vpow.pop %v1867
  %v1869 = vlaneseq
  %v1870 = vshrl.u32 %v1869, 7
  %v1871 = vsub.s32 0, %v1870
  %v1872 = vrot.slane %v1714, %v1871
  %v1873 = vmul.f32 %v1866, %v1872
  %v1874 = vmul.f32 %v1868, %v1872
  %v1875 = vadd.f32 %v1857, %v1873
  %v1876 = vadd.f32 %v1858, %v1874
  %v1877 = vsub.f32 %v1705, 0.7
  %v1878 = vsub.f32 %v1710, 0.7
  %v1879 = vmul.f32 %v1877, %v1877
  %v1880 = vmul.f32 %v1878, %v1878
  %v1881 = vmul.f32 %v1879, -50.0
  %v1882 = vmul.f32 %v1880, -50.0
  %v1883 = vmul.f32 %v1881, 1.442695
  %v1884 = vpow.pop %v1883
  %v1885 = vmul.f32 %v1882, 1.442695
  %v1886 = vpow.pop %v1885
  %v1887 = vlaneseq
  %v1888 = vshrl.u32 %v1887, 7
  %v1889 = vsub.s32 1, %v1888
  %v1890 = vrot.slane %v1714, %v1889
  %v1891 = vmul.f32 %v1884, %v1890
  %v1892 = vmul.f32 %v1886, %v1890
  %v1893 = vadd.f32 %v1875, %v1891
  %v1894 = vadd.f32 %v1876, %v1892
  %v1895 = vsub.f32 %v1705, 0.9
  %v1896 = vsub.f32 %v1710, 0.9
  %v1897 = vmul.f32 %v1895, %v1895
  %v1898 = vmul.f32 %v1896, %v1896
  %v1899 = vmul.f32 %v1897, -50.0
  %v1900 = vmul.f32 %v1898, -50.0
  %v1901 = vmul.f32 %v1899, 1.442695
  %v1902 = vpow.pop %v1901
  %v1903 = vmul.f32 %v1900, 1.442695
  %v1904 = vpow.pop %v1903
  %v1905 = vlaneseq
  %v1906 = vshrl.u32 %v1905, 7
  %v1907 = vsub.s32 2, %v1906
  %v1908 = vrot.slane %v1714, %v1907
  %v1909 = vmul.f32 %v1902, %v1908
  %v1910 = vmul.f32 %v1904, %v1908
  %v1911 = vadd.f32 %v1893, %v1909
  %v1912 = vadd.f32 %v1894, %v1910
  %v1913 = vsel %vm1527, %v1911, 0.0
  %1914 = vadd.xlane.f32.xlu0 %v1913
  %v1915 = vpop.xlane.xlu0 %1914
  %v1916 = vsel %vm1527, %v1912, 0.0
  %1917 = vadd.xlane.f32.xlu0 %v1916
  %v1918 = vpop.xlane.xlu0 %1917
  %s1919 = sld [smem:[#allocation2]]
  %v1920 = vstv %s1919
  %v1921 = vadd.f32 %v1915, %v1920
  %v1922 = vadd.f32 %v1918, %v1920
  %v1923 = vtanh.pop %v1921
  %v1924 = vtanh.pop %v1922
  %vm1925 = vcmask 7168
  %1926 = vst.msk [vmem:[%s5] sm:$0xff] %vm1925, %v1923
  %1927 = vst.msk [vmem:[%s5 + $0x8] sm:$0xff] %vm1925, %v1924
  // Predicated region
  $region22: #{kesm_forward.1} parent=0 // pred_check
    _
  $region23: #{kesm_forward.1} parent=0 // pred_check_branch
    %1929 = sbr.rel (0) target = $region25
  $region24: #{kesm_forward.1} parent=0 // pred_region
    _
  $region25: #{kesm_forward.1} parent=0 // pred_fallthru
    _
  // Predicated region
  $region26: #{kesm_forward.1} parent=0 // pred_check
    _
  $region27: #{kesm_forward.1} parent=0 // pred_check_branch
    %1931 = sbr.rel (0) target = $region29
  $region28: #{kesm_forward.1} parent=0 // pred_region
    _
  $region29: #{kesm_forward.1} parent=0 // pred_fallthru
    _

</llo_original>
